<compile_context>
chip_gen: v5e
topology: v5e:2x2
jax: 0.10.0
libtpu: 0.0.40
codegen_flags: <defaults>
</compile_context>

<pallas_src>
import functools

import jax
import jax.numpy as jnp
from jax.experimental import pallas as pl
from jax.experimental.pallas import tpu as pltpu

_EPS = 1e-5

# Flip to jnp.bfloat16 on v6e/v7x for ~2x MXU throughput / half the VMEM of the matmul
# operands (BN / stats math stays f32).  Kept f32 here so the 1e-3 check vs. the f32
# reference holds strictly.
_MATMUL_DTYPE = jnp.float32

# Below v7x's 64 MiB physical per-TC VMEM; well within v5e/v6e's 128 MiB.
_VMEM_LIMIT_BYTES = 48 * 1024 * 1024

_STATS_LANES = 128


# ----------------------------- in-kernel helpers --------------------------- #

def _build_patches(x, mask_ref, W):
    """x: (Cin, H*W) -> (9*Cin, H*W): the 9 shifted+masked taps of a 3x3 SAME conv.

    The lane shift runs on the XLU via pltpu.roll (jnp.roll semantics):
      roll(x, (-delta) % HW)[:, i] == x[:, (i + delta) % HW]
    wrapped lanes (and row-boundary wraps) are zeroed by the tap masks.
    """
    HW = x.shape[1]
    taps = []
    for kh in range(3):
        for kw in range(3):
            t = kh * 3 + kw
            dh, dw = kh - 1, kw - 1
            if dh == 0 and dw == 0:
                taps.append(x)                       # centre tap: no shift, no mask
            else:
                delta = dh * W + dw
                shifted = pltpu.roll(x, (-delta) % HW, axis=1)
                taps.append(shifted * mask_ref[t:t + 1, :])
    return jnp.concatenate(taps, axis=0)             # tap-major rows: (9*Cin, HW)


def _stats_lane_dense(y):
    """Per-channel (sum, sumsq) over the lane axis as a lane-dense (2*C, 128) block.

    The reduction runs on the XLU (which has slack); the result is broadcast over
    128 lanes so the output store is a full unmasked vst instead of a 2-lane vst.msk.
    """
    s = jnp.concatenate([jnp.sum(y, axis=1, keepdims=True),
                         jnp.sum(y * y, axis=1, keepdims=True)], axis=0)   # (2C, 1)
    return jnp.broadcast_to(s, (s.shape[0], _STATS_LANES))


# ------------------------------- kernels ----------------------------------- #

def _conv1_kernel(x_ref, w_ref, mask_ref, y_ref, stats_ref, *, W):
    """conv1 (bias dropped: cancelled by train-mode BN) + per-image stats.

    Single fused MXU dot with K = 9*Cin.
    """
    patches = _build_patches(x_ref[0], mask_ref, W)
    y = jnp.dot(w_ref[...].astype(_MATMUL_DTYPE),
                patches.astype(_MATMUL_DTYPE),
                preferred_element_type=jnp.float32)
    y_ref[0] = y
    stats_ref[0] = _stats_lane_dense(y)


def _bn_relu_conv2_kernel(y1_ref, scale_ref, shift_ref, w_ref, mask_ref,
                          y2_ref, stats_ref, *, W):
    """bn1 (precomputed scale/shift) + relu + conv2 (fused dot) + per-image stats."""
    h = jnp.maximum(y1_ref[0] * scale_ref[...] + shift_ref[...], 0.0)
    patches = _build_patches(h, mask_ref, W)
    y = jnp.dot(w_ref[...].astype(_MATMUL_DTYPE),
                patches.astype(_MATMUL_DTYPE),
                preferred_element_type=jnp.float32)
    y2_ref[0] = y
    stats_ref[0] = _stats_lane_dense(y)


def _bn_relu_res_up_kernel(x_ref, y2_ref, scale_ref, shift_ref, wt_ref, bt_ref,
                           o_ref):
    """bn2 + relu, ResBlock residual, ConvTranspose2d(k=2,s=2) as one matmul."""
    h = jnp.maximum(y2_ref[0] * scale_ref[...] + shift_ref[...], 0.0)
    r = x_ref[0] + h                       # residual (requires in_c == out_c)
    o_ref[0] = (jnp.dot(wt_ref[...].astype(_MATMUL_DTYPE),
                        r.astype(_MATMUL_DTYPE),
                        preferred_element_type=jnp.float32) + bt_ref[...])


# ------------------------------ JAX glue ----------------------------------- #

def _tap_masks(H, W):
    """(9, H*W) f32 validity masks for the 9 taps of a 3x3 pad-1 conv."""
    i = jnp.arange(H * W, dtype=jnp.int32)
    h, w = i // W, i % W
    rows = []
    for kh in range(3):
        for kw in range(3):
            dh, dw = kh - 1, kw - 1
            ok = (h + dh >= 0) & (h + dh < H) & (w + dw >= 0) & (w + dw < W)
            rows.append(ok.astype(jnp.float32))
    return jnp.stack(rows, axis=0)


def _lane_tile(hw, max_lanes=8192):
    """Pass-C lane tile: full HW when small, else a 128-multiple with a cdiv grid.

    The ragged tail (if any) is handled by Pallas block padding / masked writeback,
    which is safe here because pass C is purely per-lane (no cross-lane ops).
    """
    if hw <= max_lanes:
        return hw
    return max_lanes - max_lanes % 128


def init_params(key, in_c, out_c):
    mid = 2 * in_c
    ks = jax.random.split(key, 10)
    return dict(
        # nn.Conv2d(in_c, 2*in_c, 3, padding=1): weight (mid, in_c, 3, 3)
        w1=0.1 * jax.random.normal(ks[0], (mid, in_c, 3, 3), jnp.float32),
        b1=0.1 * jax.random.normal(ks[1], (mid,), jnp.float32),
        g1=1.0 + 0.1 * jax.random.normal(ks[2], (mid,), jnp.float32),
        beta1=0.1 * jax.random.normal(ks[3], (mid,), jnp.float32),
        # nn.Conv2d(2*in_c, out_c, 3, padding=1): weight (out_c, mid, 3, 3)
        w2=0.1 * jax.random.normal(ks[4], (out_c, mid, 3, 3), jnp.float32),
        b2=0.1 * jax.random.normal(ks[5], (out_c,), jnp.float32),
        g2=1.0 + 0.1 * jax.random.normal(ks[6], (out_c,), jnp.float32),
        beta2=0.1 * jax.random.normal(ks[7], (out_c,), jnp.float32),
        # nn.ConvTranspose2d(in_c, out_c, 2, 2): weight (in_c, out_c, 2, 2)
        wt=0.1 * jax.random.normal(ks[8], (in_c, out_c, 2, 2), jnp.float32),
        bt=0.1 * jax.random.normal(ks[9], (out_c,), jnp.float32),
    )


def decoder_block_forward(params, inputs_nchw, skip_nchw):
    """Equivalent of decoder_block.forward(inputs, skip); returns NCHW."""
    N, in_c, H, W = inputs_nchw.shape
    mid = params['w1'].shape[0]
    out_c = params['w2'].shape[0]
    assert in_c == out_c, "ResBlock residual / up-conv require in_c == out_c"
    HW = H * W
    cnt = float(N * HW)

    # NCHW -> (N, C, H*W): channel-major, metadata-only reshape (no transpose).
    x = inputs_nchw.reshape(N, in_c, HW).astype(jnp.float32)
    masks = _tap_masks(H, W)

    cp_img = pltpu.CompilerParams(dimension_semantics=("parallel",),
                                  vmem_limit_bytes=_VMEM_LIMIT_BYTES)

    # ---- pass A: conv1 (fused K=9*in_c dot) + per-image stats -----------------
    # (co, ci, kh, kw) -> (co, kh, kw, ci) -> (co, 9*ci): matches tap-major patches.
    w1f = jnp.transpose(params['w1'], (0, 2, 3, 1)).reshape(mid, 9 * in_c)
    y1, stats1 = pl.pallas_call(
        functools.partial(_conv1_kernel, W=W),
        grid=(N,),
        in_specs=[pl.BlockSpec((1, in_c, HW), lambda n: (n, 0, 0)),
                  pl.BlockSpec((mid, 9 * in_c), lambda n: (0, 0)),
                  pl.BlockSpec((9, HW), lambda n: (0, 0))],
        out_specs=(pl.BlockSpec((1, mid, HW), lambda n: (n, 0, 0)),
                   pl.BlockSpec((1, 2 * mid, _STATS_LANES), lambda n: (n, 0, 0))),
        out_shape=(jax.ShapeDtypeStruct((N, mid, HW), jnp.float32),
                   jax.ShapeDtypeStruct((N, 2 * mid, _STATS_LANES), jnp.float32)),
        compiler_params=cp_img,
    )(x, w1f, masks)

    s1 = jnp.sum(stats1[:, :, 0], axis=0)          # (2*mid,) -> [sums, sumsqs]
    mean1 = s1[:mid] / cnt
    var1 = jnp.maximum(s1[mid:] / cnt - mean1 * mean1, 0.0)
    scale1 = (params['g1'] * jax.lax.rsqrt(var1 + _EPS)).reshape(mid, 1)
    shift1 = (params['beta1'] - mean1 * scale1[:, 0]).reshape(mid, 1)

    # ---- pass B: bn1 + relu + conv2 (fused K=9*mid dot) + per-image stats ------
    w2f = jnp.transpose(params['w2'], (0, 2, 3, 1)).reshape(out_c, 9 * mid)
    y2, stats2 = pl.pallas_call(
        functools.partial(_bn_relu_conv2_kernel, W=W),
        grid=(N,),
        in_specs=[pl.BlockSpec((1, mid, HW), lambda n: (n, 0, 0)),
                  pl.BlockSpec((mid, 1), lambda n: (0, 0)),
                  pl.BlockSpec((mid, 1), lambda n: (0, 0)),
                  pl.BlockSpec((out_c, 9 * mid), lambda n: (0, 0)),
                  pl.BlockSpec((9, HW), lambda n: (0, 0))],
        out_specs=(pl.BlockSpec((1, out_c, HW), lambda n: (n, 0, 0)),
                   pl.BlockSpec((1, 2 * out_c, _STATS_LANES), lambda n: (n, 0, 0))),
        out_shape=(jax.ShapeDtypeStruct((N, out_c, HW), jnp.float32),
                   jax.ShapeDtypeStruct((N, 2 * out_c, _STATS_LANES), jnp.float32)),
        compiler_params=cp_img,
    )(y1, scale1, shift1, w2f, masks)

    s2 = jnp.sum(stats2[:, :, 0], axis=0)
    mean2 = s2[:out_c] / cnt
    var2 = jnp.maximum(s2[out_c:] / cnt - mean2 * mean2, 0.0)
    scale2 = (params['g2'] * jax.lax.rsqrt(var2 + _EPS)).reshape(out_c, 1)
    shift2 = (params['beta2'] - mean2 * scale2[:, 0]).reshape(out_c, 1)

    # ---- pass C: bn2 + relu + residual + ConvTranspose2d(k=2,s=2) --------------
    # (ci, co, kh, kw) -> rows ordered (co, kh, kw): (4*out_c, in_c)
    wtm = jnp.transpose(params['wt'], (1, 2, 3, 0)).reshape(4 * out_c, in_c)
    btm = jnp.repeat(params['bt'], 4).reshape(4 * out_c, 1)
    lt = _lane_tile(HW)
    up = pl.pallas_call(
        _bn_relu_res_up_kernel,
        grid=(N, pl.cdiv(HW, lt)),
        in_specs=[pl.BlockSpec((1, in_c, lt), lambda n, l: (n, 0, l)),
                  pl.BlockSpec((1, out_c, lt), lambda n, l: (n, 0, l)),
                  pl.BlockSpec((out_c, 1), lambda n, l: (0, 0)),
                  pl.BlockSpec((out_c, 1), lambda n, l: (0, 0)),
                  pl.BlockSpec((4 * out_c, in_c), lambda n, l: (0, 0)),
                  pl.BlockSpec((4 * out_c, 1), lambda n, l: (0, 0))],
        out_specs=pl.BlockSpec((1, 4 * out_c, lt), lambda n, l: (n, 0, l)),
        out_shape=jax.ShapeDtypeStruct((N, 4 * out_c, HW), jnp.float32),
        compiler_params=pltpu.CompilerParams(
            dimension_semantics=("parallel", "parallel"),
            vmem_limit_bytes=_VMEM_LIMIT_BYTES),
    )(x, y2, scale2, shift2, wtm, btm)

    # TODO(synk): the 2x2 pixel-shuffle interleave and the channel concat with skip
    # remain one fused XLA transpose+concat over the largest tensor; a robust
    # lane-granularity-1 interleave / strided output scatter has no clean Pallas
    # block-spec form today (the kh/kw dims would need a last-dim block of 1 or 2).
    up = up.reshape(N, out_c, 2, 2, H, W)
    up = jnp.transpose(up, (0, 1, 4, 2, 5, 3)).reshape(N, out_c, 2 * H, 2 * W)
    return jnp.concatenate([up, skip_nchw.astype(jnp.float32)], axis=1)


# ------------------------- pure-JAX reference ------------------------------ #

def _reference(params, inputs, skip):
    def conv(x, w, b):
        y = jax.lax.conv_general_dilated(
            x, w, (1, 1), 'SAME', dimension_numbers=('NCHW', 'OIHW', 'NCHW'))
        return y + b[None, :, None, None]

    def bn(x, g, beta):
        mean = jnp.mean(x, axis=(0, 2, 3), keepdims=True)
        var = jnp.mean((x - mean) ** 2, axis=(0, 2, 3), keepdims=True)
        return ((x - mean) * jax.lax.rsqrt(var + _EPS)
                * g[None, :, None, None] + beta[None, :, None, None])

    h = jax.nn.relu(bn(conv(inputs, params['w1'], params['b1']),
                       params['g1'], params['beta1']))
    h = jax.nn.relu(bn(conv(h, params['w2'], params['b2']),
                       params['g2'], params['beta2']))
    r = inputs + h
    t = jnp.einsum('nihw,iokl->nohkwl', r, params['wt'])
    N, Co, H, _, W, _ = t.shape
    up = t.reshape(N, Co, 2 * H, 2 * W) + params['bt'][None, :, None, None]
    return jnp.concatenate([up, skip], axis=1)


if __name__ == "__main__":
    key = jax.random.PRNGKey(0)
    kp, ki, ks = jax.random.split(key, 3)

    in_c = out_c = 4
    N, H, W = 2, 16, 16

    params = init_params(kp, in_c, out_c)
    inputs = jax.random.normal(ki, (N, in_c, H, W), jnp.float32)
    skip = jax.random.normal(ks, (N, out_c, 2 * H, 2 * W), jnp.float32)

    fwd = jax.jit(decoder_block_forward)
    out = jax.block_until_ready(fwd(params, inputs, skip))
    assert out.shape == (N, 2 * out_c, 2 * H, 2 * W), out.shape

    ref = _reference(params, inputs, skip)
    max_err = float(jnp.max(jnp.abs(out - ref)))
    assert jnp.allclose(out, ref, atol=1e-3, rtol=1e-3), max_err

    print("KERNEL_OK")
</pallas_src>

<mosaic_0001>
module attributes {stable_mosaic.version = 11 : i64} {
  func.func @_conv1_kernel(%arg0: i32, %arg1: memref<1x4x256xf32, #tpu.memory_space<vmem>>, %arg2: memref<8x36xf32, #tpu.memory_space<vmem>>, %arg3: memref<9x256xf32, #tpu.memory_space<vmem>>, %arg4: memref<1x8x256xf32, #tpu.memory_space<vmem>>, %arg5: memref<1x16x128xf32, #tpu.memory_space<vmem>>) attributes {dimension_semantics = [#tpu.dimension_semantics<parallel>], iteration_bounds = array<i64: 2>, scalar_prefetch = 0 : i64, scratch_operands = 0 : i64, tpu.core_type = #tpu.core_type<tc>, window_params = [{transform_indices = @transform_0, window_bounds = array<i64: 1, 4, 256>}, {pipeline_mode = #tpu.pipeline_mode<synchronous>, transform_indices = @transform_1, window_bounds = array<i64: 8, 36>}, {pipeline_mode = #tpu.pipeline_mode<synchronous>, transform_indices = @transform_2, window_bounds = array<i64: 9, 256>}, {transform_indices = @transform_3, window_bounds = array<i64: 1, 8, 256>}, {transform_indices = @transform_4, window_bounds = array<i64: 1, 16, 128>}]} {
    %c0 = arith.constant 0 : index
    %c0_0 = arith.constant 0 : index
    %c0_1 = arith.constant 0 : index
    %0 = vector.load %arg1[%c0, %c0_0, %c0_1] : memref<1x4x256xf32, #tpu.memory_space<vmem>>, vector<1x4x256xf32>
    %1 = vector.shape_cast %0 : vector<1x4x256xf32> to vector<4x256xf32>
    %c17_i32 = arith.constant 17 : i32
    %2 = tpu.dynamic_rotate %1 by %c17_i32 dim 1 : vector<4x256xf32>, i32 -> vector<4x256xf32>
    %c0_2 = arith.constant 0 : index
    %c0_3 = arith.constant 0 : index
    %3 = vector.load %arg3[%c0_2, %c0_3] : memref<9x256xf32, #tpu.memory_space<vmem>>, vector<1x256xf32>
    %4 = vector.broadcast %3 : vector<1x256xf32> to vector<4x256xf32>
    %5 = arith.mulf %2, %4 : vector<4x256xf32>
    %c16_i32 = arith.constant 16 : i32
    %6 = tpu.dynamic_rotate %1 by %c16_i32 dim 1 : vector<4x256xf32>, i32 -> vector<4x256xf32>
    %c1 = arith.constant 1 : index
    %c0_4 = arith.constant 0 : index
    %7 = vector.load %arg3[%c1, %c0_4] : memref<9x256xf32, #tpu.memory_space<vmem>>, vector<1x256xf32>
    %8 = vector.broadcast %7 : vector<1x256xf32> to vector<4x256xf32>
    %9 = arith.mulf %6, %8 : vector<4x256xf32>
    %c15_i32 = arith.constant 15 : i32
    %10 = tpu.dynamic_rotate %1 by %c15_i32 dim 1 : vector<4x256xf32>, i32 -> vector<4x256xf32>
    %c2 = arith.constant 2 : index
    %c0_5 = arith.constant 0 : index
    %11 = vector.load %arg3[%c2, %c0_5] : memref<9x256xf32, #tpu.memory_space<vmem>>, vector<1x256xf32>
    %12 = vector.broadcast %11 : vector<1x256xf32> to vector<4x256xf32>
    %13 = arith.mulf %10, %12 : vector<4x256xf32>
    %c1_i32 = arith.constant 1 : i32
    %14 = tpu.dynamic_rotate %1 by %c1_i32 dim 1 : vector<4x256xf32>, i32 -> vector<4x256xf32>
    %c3 = arith.constant 3 : index
    %c0_6 = arith.constant 0 : index
    %15 = vector.load %arg3[%c3, %c0_6] : memref<9x256xf32, #tpu.memory_space<vmem>>, vector<1x256xf32>
    %16 = vector.broadcast %15 : vector<1x256xf32> to vector<4x256xf32>
    %17 = arith.mulf %14, %16 : vector<4x256xf32>
    %c255_i32 = arith.constant 255 : i32
    %18 = tpu.dynamic_rotate %1 by %c255_i32 dim 1 : vector<4x256xf32>, i32 -> vector<4x256xf32>
    %c5 = arith.constant 5 : index
    %c0_7 = arith.constant 0 : index
    %19 = vector.load %arg3[%c5, %c0_7] : memref<9x256xf32, #tpu.memory_space<vmem>>, vector<1x256xf32>
    %20 = vector.broadcast %19 : vector<1x256xf32> to vector<4x256xf32>
    %21 = arith.mulf %18, %20 : vector<4x256xf32>
    %c241_i32 = arith.constant 241 : i32
    %22 = tpu.dynamic_rotate %1 by %c241_i32 dim 1 : vector<4x256xf32>, i32 -> vector<4x256xf32>
    %c6 = arith.constant 6 : index
    %c0_8 = arith.constant 0 : index
    %23 = vector.load %arg3[%c6, %c0_8] : memref<9x256xf32, #tpu.memory_space<vmem>>, vector<1x256xf32>
    %24 = vector.broadcast %23 : vector<1x256xf32> to vector<4x256xf32>
    %25 = arith.mulf %22, %24 : vector<4x256xf32>
    %c240_i32 = arith.constant 240 : i32
    %26 = tpu.dynamic_rotate %1 by %c240_i32 dim 1 : vector<4x256xf32>, i32 -> vector<4x256xf32>
    %c7 = arith.constant 7 : index
    %c0_9 = arith.constant 0 : index
    %27 = vector.load %arg3[%c7, %c0_9] : memref<9x256xf32, #tpu.memory_space<vmem>>, vector<1x256xf32>
    %28 = vector.broadcast %27 : vector<1x256xf32> to vector<4x256xf32>
    %29 = arith.mulf %26, %28 : vector<4x256xf32>
    %c239_i32 = arith.constant 239 : i32
    %30 = tpu.dynamic_rotate %1 by %c239_i32 dim 1 : vector<4x256xf32>, i32 -> vector<4x256xf32>
    %c8 = arith.constant 8 : index
    %c0_10 = arith.constant 0 : index
    %31 = vector.load %arg3[%c8, %c0_10] : memref<9x256xf32, #tpu.memory_space<vmem>>, vector<1x256xf32>
    %32 = vector.broadcast %31 : vector<1x256xf32> to vector<4x256xf32>
    %33 = arith.mulf %30, %32 : vector<4x256xf32>
    %34 = tpu.concatenate %5, %9, %13, %17, %1, %21, %25, %29, %33 in 0 : vector<4x256xf32>, vector<4x256xf32>, vector<4x256xf32>, vector<4x256xf32>, vector<4x256xf32>, vector<4x256xf32>, vector<4x256xf32>, vector<4x256xf32>, vector<4x256xf32> -> vector<36x256xf32>
    %c0_11 = arith.constant 0 : index
    %c0_12 = arith.constant 0 : index
    %35 = vector.load %arg2[%c0_11, %c0_12] : memref<8x36xf32, #tpu.memory_space<vmem>>, vector<8x36xf32>
    %cst = arith.constant dense<0.000000e+00> : vector<8x256xf32>
    %36 = tpu.matmul %35, %34, %cst {dimension_numbers = #tpu.dot_dimension_numbers<[1], [0], [0], [1], [0, 0, 1, 1], [], []>} : vector<8x36xf32>, vector<36x256xf32>, vector<8x256xf32> -> vector<8x256xf32>
    %c0_13 = arith.constant 0 : index
    %c0_14 = arith.constant 0 : index
    %c0_15 = arith.constant 0 : index
    %37 = vector.load %arg4[%c0_13, %c0_14, %c0_15] : memref<1x8x256xf32, #tpu.memory_space<vmem>>, vector<1x8x256xf32>
    %38 = vector.shape_cast %37 : vector<1x8x256xf32> to vector<8x256xf32>
    %39 = vector.shape_cast %36 : vector<8x256xf32> to vector<1x8x256xf32>
    tpu.vector_store %arg4[%c0_13, %c0_14, %c0_15], %39 {strides = array<i32>} : memref<1x8x256xf32, #tpu.memory_space<vmem>>, vector<1x8x256xf32>,
    %cst_16 = arith.constant dense<0.000000e+00> : vector<8xf32>
    %40 = vector.multi_reduction <add>, %36, %cst_16 [1] : vector<8x256xf32> to vector<8xf32>
    %41 = vector.shape_cast %40 : vector<8xf32> to vector<8x1xf32>
    %42 = arith.mulf %36, %36 : vector<8x256xf32>
    %cst_17 = arith.constant dense<0.000000e+00> : vector<8xf32>
    %43 = vector.multi_reduction <add>, %42, %cst_17 [1] : vector<8x256xf32> to vector<8xf32>
    %44 = vector.shape_cast %43 : vector<8xf32> to vector<8x1xf32>
    %45 = tpu.concatenate %41, %44 in 0 : vector<8x1xf32>, vector<8x1xf32> -> vector<16x1xf32>
    %46 = vector.shape_cast %45 : vector<16x1xf32> to vector<16x1xf32>
    %47 = vector.broadcast %46 : vector<16x1xf32> to vector<16x128xf32>
    %c0_18 = arith.constant 0 : index
    %c0_19 = arith.constant 0 : index
    %c0_20 = arith.constant 0 : index
    %48 = vector.load %arg5[%c0_18, %c0_19, %c0_20] : memref<1x16x128xf32, #tpu.memory_space<vmem>>, vector<1x16x128xf32>
    %49 = vector.shape_cast %48 : vector<1x16x128xf32> to vector<16x128xf32>
    %50 = vector.shape_cast %47 : vector<16x128xf32> to vector<1x16x128xf32>
    tpu.vector_store %arg5[%c0_18, %c0_19, %c0_20], %50 {strides = array<i32>} : memref<1x16x128xf32, #tpu.memory_space<vmem>>, vector<1x16x128xf32>,
    return
  }
  func.func @transform_0(%arg0: i32) -> (i32, i32, i32) {
    %c0_i32 = arith.constant 0 : i32
    %c0_i32_0 = arith.constant 0 : i32
    %c0_i32_1 = arith.constant 0 : i32
    return %arg0, %c0_i32, %c0_i32_0 : i32, i32, i32
  }
  func.func @transform_1(%arg0: i32) -> (i32, i32) {
    %c0_i32 = arith.constant 0 : i32
    %c0_i32_0 = arith.constant 0 : i32
    %c0_i32_1 = arith.constant 0 : i32
    return %c0_i32, %c0_i32_0 : i32, i32
  }
  func.func @transform_2(%arg0: i32) -> (i32, i32) {
    %c0_i32 = arith.constant 0 : i32
    %c0_i32_0 = arith.constant 0 : i32
    %c0_i32_1 = arith.constant 0 : i32
    return %c0_i32, %c0_i32_0 : i32, i32
  }
  func.func @transform_3(%arg0: i32) -> (i32, i32, i32) {
    %c0_i32 = arith.constant 0 : i32
    %c0_i32_0 = arith.constant 0 : i32
    %c0_i32_1 = arith.constant 0 : i32
    return %arg0, %c0_i32, %c0_i32_0 : i32, i32, i32
  }
  func.func @transform_4(%arg0: i32) -> (i32, i32, i32) {
    %c0_i32 = arith.constant 0 : i32
    %c0_i32_0 = arith.constant 0 : i32
    %c0_i32_1 = arith.constant 0 : i32
    return %arg0, %c0_i32, %c0_i32_0 : i32, i32, i32
  }
}

module attributes {stable_mosaic.version = 11 : i64} {
  func.func @_bn_relu_conv2_kernel(%arg0: i32, %arg1: memref<1x8x256xf32, #tpu.memory_space<vmem>>, %arg2: memref<8x1xf32, #tpu.memory_space<vmem>>, %arg3: memref<8x1xf32, #tpu.memory_space<vmem>>, %arg4: memref<4x72xf32, #tpu.memory_space<vmem>>, %arg5: memref<9x256xf32, #tpu.memory_space<vmem>>, %arg6: memref<1x4x256xf32, #tpu.memory_space<vmem>>, %arg7: memref<1x8x128xf32, #tpu.memory_space<vmem>>) attributes {dimension_semantics = [#tpu.dimension_semantics<parallel>], iteration_bounds = array<i64: 2>, scalar_prefetch = 0 : i64, scratch_operands = 0 : i64, tpu.core_type = #tpu.core_type<tc>, window_params = [{transform_indices = @transform_0, window_bounds = array<i64: 1, 8, 256>}, {pipeline_mode = #tpu.pipeline_mode<synchronous>, transform_indices = @transform_1, window_bounds = array<i64: 8, 1>}, {pipeline_mode = #tpu.pipeline_mode<synchronous>, transform_indices = @transform_2, window_bounds = array<i64: 8, 1>}, {pipeline_mode = #tpu.pipeline_mode<synchronous>, transform_indices = @transform_3, window_bounds = array<i64: 4, 72>}, {pipeline_mode = #tpu.pipeline_mode<synchronous>, transform_indices = @transform_4, window_bounds = array<i64: 9, 256>}, {transform_indices = @transform_5, window_bounds = array<i64: 1, 4, 256>}, {transform_indices = @transform_6, window_bounds = array<i64: 1, 8, 128>}]} {
    %c0 = arith.constant 0 : index
    %c0_0 = arith.constant 0 : index
    %c0_1 = arith.constant 0 : index
    %0 = vector.load %arg1[%c0, %c0_0, %c0_1] : memref<1x8x256xf32, #tpu.memory_space<vmem>>, vector<1x8x256xf32>
    %1 = vector.shape_cast %0 : vector<1x8x256xf32> to vector<8x256xf32>
    %c0_2 = arith.constant 0 : index
    %c0_3 = arith.constant 0 : index
    %2 = vector.load %arg2[%c0_2, %c0_3] : memref<8x1xf32, #tpu.memory_space<vmem>>, vector<8x1xf32>
    %3 = vector.broadcast %2 : vector<8x1xf32> to vector<8x256xf32>
    %4 = arith.mulf %1, %3 : vector<8x256xf32>
    %c0_4 = arith.constant 0 : index
    %c0_5 = arith.constant 0 : index
    %5 = vector.load %arg3[%c0_4, %c0_5] : memref<8x1xf32, #tpu.memory_space<vmem>>, vector<8x1xf32>
    %6 = vector.broadcast %5 : vector<8x1xf32> to vector<8x256xf32>
    %7 = arith.addf %4, %6 : vector<8x256xf32>
    %cst = arith.constant 0.000000e+00 : f32
    %8 = vector.broadcast %cst : f32 to vector<8x256xf32>
    %9 = arith.maximumf %7, %8 : vector<8x256xf32>
    %c17_i32 = arith.constant 17 : i32
    %10 = tpu.dynamic_rotate %9 by %c17_i32 dim 1 : vector<8x256xf32>, i32 -> vector<8x256xf32>
    %c0_6 = arith.constant 0 : index
    %c0_7 = arith.constant 0 : index
    %11 = vector.load %arg5[%c0_6, %c0_7] : memref<9x256xf32, #tpu.memory_space<vmem>>, vector<1x256xf32>
    %12 = vector.broadcast %11 : vector<1x256xf32> to vector<8x256xf32>
    %13 = arith.mulf %10, %12 : vector<8x256xf32>
    %c16_i32 = arith.constant 16 : i32
    %14 = tpu.dynamic_rotate %9 by %c16_i32 dim 1 : vector<8x256xf32>, i32 -> vector<8x256xf32>
    %c1 = arith.constant 1 : index
    %c0_8 = arith.constant 0 : index
    %15 = vector.load %arg5[%c1, %c0_8] : memref<9x256xf32, #tpu.memory_space<vmem>>, vector<1x256xf32>
    %16 = vector.broadcast %15 : vector<1x256xf32> to vector<8x256xf32>
    %17 = arith.mulf %14, %16 : vector<8x256xf32>
    %c15_i32 = arith.constant 15 : i32
    %18 = tpu.dynamic_rotate %9 by %c15_i32 dim 1 : vector<8x256xf32>, i32 -> vector<8x256xf32>
    %c2 = arith.constant 2 : index
    %c0_9 = arith.constant 0 : index
    %19 = vector.load %arg5[%c2, %c0_9] : memref<9x256xf32, #tpu.memory_space<vmem>>, vector<1x256xf32>
    %20 = vector.broadcast %19 : vector<1x256xf32> to vector<8x256xf32>
    %21 = arith.mulf %18, %20 : vector<8x256xf32>
    %c1_i32 = arith.constant 1 : i32
    %22 = tpu.dynamic_rotate %9 by %c1_i32 dim 1 : vector<8x256xf32>, i32 -> vector<8x256xf32>
    %c3 = arith.constant 3 : index
    %c0_10 = arith.constant 0 : index
    %23 = vector.load %arg5[%c3, %c0_10] : memref<9x256xf32, #tpu.memory_space<vmem>>, vector<1x256xf32>
    %24 = vector.broadcast %23 : vector<1x256xf32> to vector<8x256xf32>
    %25 = arith.mulf %22, %24 : vector<8x256xf32>
    %c255_i32 = arith.constant 255 : i32
    %26 = tpu.dynamic_rotate %9 by %c255_i32 dim 1 : vector<8x256xf32>, i32 -> vector<8x256xf32>
    %c5 = arith.constant 5 : index
    %c0_11 = arith.constant 0 : index
    %27 = vector.load %arg5[%c5, %c0_11] : memref<9x256xf32, #tpu.memory_space<vmem>>, vector<1x256xf32>
    %28 = vector.broadcast %27 : vector<1x256xf32> to vector<8x256xf32>
    %29 = arith.mulf %26, %28 : vector<8x256xf32>
    %c241_i32 = arith.constant 241 : i32
    %30 = tpu.dynamic_rotate %9 by %c241_i32 dim 1 : vector<8x256xf32>, i32 -> vector<8x256xf32>
    %c6 = arith.constant 6 : index
    %c0_12 = arith.constant 0 : index
    %31 = vector.load %arg5[%c6, %c0_12] : memref<9x256xf32, #tpu.memory_space<vmem>>, vector<1x256xf32>
    %32 = vector.broadcast %31 : vector<1x256xf32> to vector<8x256xf32>
    %33 = arith.mulf %30, %32 : vector<8x256xf32>
    %c240_i32 = arith.constant 240 : i32
    %34 = tpu.dynamic_rotate %9 by %c240_i32 dim 1 : vector<8x256xf32>, i32 -> vector<8x256xf32>
    %c7 = arith.constant 7 : index
    %c0_13 = arith.constant 0 : index
    %35 = vector.load %arg5[%c7, %c0_13] : memref<9x256xf32, #tpu.memory_space<vmem>>, vector<1x256xf32>
    %36 = vector.broadcast %35 : vector<1x256xf32> to vector<8x256xf32>
    %37 = arith.mulf %34, %36 : vector<8x256xf32>
    %c239_i32 = arith.constant 239 : i32
    %38 = tpu.dynamic_rotate %9 by %c239_i32 dim 1 : vector<8x256xf32>, i32 -> vector<8x256xf32>
    %c8 = arith.constant 8 : index
    %c0_14 = arith.constant 0 : index
    %39 = vector.load %arg5[%c8, %c0_14] : memref<9x256xf32, #tpu.memory_space<vmem>>, vector<1x256xf32>
    %40 = vector.broadcast %39 : vector<1x256xf32> to vector<8x256xf32>
    %41 = arith.mulf %38, %40 : vector<8x256xf32>
    %42 = tpu.concatenate %13, %17, %21, %25, %9, %29, %33, %37, %41 in 0 : vector<8x256xf32>, vector<8x256xf32>, vector<8x256xf32>, vector<8x256xf32>, vector<8x256xf32>, vector<8x256xf32>, vector<8x256xf32>, vector<8x256xf32>, vector<8x256xf32> -> vector<72x256xf32>
    %c0_15 = arith.constant 0 : index
    %c0_16 = arith.constant 0 : index
    %43 = vector.load %arg4[%c0_15, %c0_16] : memref<4x72xf32, #tpu.memory_space<vmem>>, vector<4x72xf32>
    %cst_17 = arith.constant dense<0.000000e+00> : vector<4x256xf32>
    %44 = tpu.matmul %43, %42, %cst_17 {dimension_numbers = #tpu.dot_dimension_numbers<[1], [0], [0], [1], [0, 0, 1, 1], [], []>} : vector<4x72xf32>, vector<72x256xf32>, vector<4x256xf32> -> vector<4x256xf32>
    %c0_18 = arith.constant 0 : index
    %c0_19 = arith.constant 0 : index
    %c0_20 = arith.constant 0 : index
    %45 = vector.load %arg6[%c0_18, %c0_19, %c0_20] : memref<1x4x256xf32, #tpu.memory_space<vmem>>, vector<1x4x256xf32>
    %46 = vector.shape_cast %45 : vector<1x4x256xf32> to vector<4x256xf32>
    %47 = vector.shape_cast %44 : vector<4x256xf32> to vector<1x4x256xf32>
    tpu.vector_store %arg6[%c0_18, %c0_19, %c0_20], %47 {strides = array<i32>} : memref<1x4x256xf32, #tpu.memory_space<vmem>>, vector<1x4x256xf32>,
    %cst_21 = arith.constant dense<0.000000e+00> : vector<4xf32>
    %48 = vector.multi_reduction <add>, %44, %cst_21 [1] : vector<4x256xf32> to vector<4xf32>
    %49 = vector.shape_cast %48 : vector<4xf32> to vector<4x1xf32>
    %50 = arith.mulf %44, %44 : vector<4x256xf32>
    %cst_22 = arith.constant dense<0.000000e+00> : vector<4xf32>
    %51 = vector.multi_reduction <add>, %50, %cst_22 [1] : vector<4x256xf32> to vector<4xf32>
    %52 = vector.shape_cast %51 : vector<4xf32> to vector<4x1xf32>
    %53 = tpu.concatenate %49, %52 in 0 : vector<4x1xf32>, vector<4x1xf32> -> vector<8x1xf32>
    %54 = vector.shape_cast %53 : vector<8x1xf32> to vector<8x1xf32>
    %55 = vector.broadcast %54 : vector<8x1xf32> to vector<8x128xf32>
    %c0_23 = arith.constant 0 : index
    %c0_24 = arith.constant 0 : index
    %c0_25 = arith.constant 0 : index
    %56 = vector.load %arg7[%c0_23, %c0_24, %c0_25] : memref<1x8x128xf32, #tpu.memory_space<vmem>>, vector<1x8x128xf32>
    %57 = vector.shape_cast %56 : vector<1x8x128xf32> to vector<8x128xf32>
    %58 = vector.shape_cast %55 : vector<8x128xf32> to vector<1x8x128xf32>
    tpu.vector_store %arg7[%c0_23, %c0_24, %c0_25], %58 {strides = array<i32>} : memref<1x8x128xf32, #tpu.memory_space<vmem>>, vector<1x8x128xf32>,
    return
  }
  func.func @transform_0(%arg0: i32) -> (i32, i32, i32) {
    %c0_i32 = arith.constant 0 : i32
    %c0_i32_0 = arith.constant 0 : i32
    %c0_i32_1 = arith.constant 0 : i32
    return %arg0, %c0_i32, %c0_i32_0 : i32, i32, i32
  }
  func.func @transform_1(%arg0: i32) -> (i32, i32) {
    %c0_i32 = arith.constant 0 : i32
    %c0_i32_0 = arith.constant 0 : i32
    %c0_i32_1 = arith.constant 0 : i32
    return %c0_i32, %c0_i32_0 : i32, i32
  }
  func.func @transform_2(%arg0: i32) -> (i32, i32) {
    %c0_i32 = arith.constant 0 : i32
    %c0_i32_0 = arith.constant 0 : i32
    %c0_i32_1 = arith.constant 0 : i32
    return %c0_i32, %c0_i32_0 : i32, i32
  }
  func.func @transform_3(%arg0: i32) -> (i32, i32) {
    %c0_i32 = arith.constant 0 : i32
    %c0_i32_0 = arith.constant 0 : i32
    %c0_i32_1 = arith.constant 0 : i32
    return %c0_i32, %c0_i32_0 : i32, i32
  }
  func.func @transform_4(%arg0: i32) -> (i32, i32) {
    %c0_i32 = arith.constant 0 : i32
    %c0_i32_0 = arith.constant 0 : i32
    %c0_i32_1 = arith.constant 0 : i32
    return %c0_i32, %c0_i32_0 : i32, i32
  }
  func.func @transform_5(%arg0: i32) -> (i32, i32, i32) {
    %c0_i32 = arith.constant 0 : i32
    %c0_i32_0 = arith.constant 0 : i32
    %c0_i32_1 = arith.constant 0 : i32
    return %arg0, %c0_i32, %c0_i32_0 : i32, i32, i32
  }
  func.func @transform_6(%arg0: i32) -> (i32, i32, i32) {
    %c0_i32 = arith.constant 0 : i32
    %c0_i32_0 = arith.constant 0 : i32
    %c0_i32_1 = arith.constant 0 : i32
    return %arg0, %c0_i32, %c0_i32_0 : i32, i32, i32
  }
}

module attributes {stable_mosaic.version = 11 : i64} {
  func.func @_bn_relu_res_up_kernel(%arg0: i32, %arg1: i32, %arg2: memref<1x4x256xf32, #tpu.memory_space<vmem>>, %arg3: memref<1x4x256xf32, #tpu.memory_space<vmem>>, %arg4: memref<4x1xf32, #tpu.memory_space<vmem>>, %arg5: memref<4x1xf32, #tpu.memory_space<vmem>>, %arg6: memref<16x4xf32, #tpu.memory_space<vmem>>, %arg7: memref<16x1xf32, #tpu.memory_space<vmem>>, %arg8: memref<1x16x256xf32, #tpu.memory_space<vmem>>) attributes {dimension_semantics = [#tpu.dimension_semantics<parallel>, #tpu.dimension_semantics<parallel>], iteration_bounds = array<i64: 2, 1>, scalar_prefetch = 0 : i64, scratch_operands = 0 : i64, tpu.core_type = #tpu.core_type<tc>, window_params = [{transform_indices = @transform_0, window_bounds = array<i64: 1, 4, 256>}, {transform_indices = @transform_1, window_bounds = array<i64: 1, 4, 256>}, {pipeline_mode = #tpu.pipeline_mode<synchronous>, transform_indices = @transform_2, window_bounds = array<i64: 4, 1>}, {pipeline_mode = #tpu.pipeline_mode<synchronous>, transform_indices = @transform_3, window_bounds = array<i64: 4, 1>}, {pipeline_mode = #tpu.pipeline_mode<synchronous>, transform_indices = @transform_4, window_bounds = array<i64: 16, 4>}, {pipeline_mode = #tpu.pipeline_mode<synchronous>, transform_indices = @transform_5, window_bounds = array<i64: 16, 1>}, {transform_indices = @transform_6, window_bounds = array<i64: 1, 16, 256>}]} {
    %c0 = arith.constant 0 : index
    %c0_0 = arith.constant 0 : index
    %c0_1 = arith.constant 0 : index
    %0 = vector.load %arg3[%c0, %c0_0, %c0_1] : memref<1x4x256xf32, #tpu.memory_space<vmem>>, vector<1x4x256xf32>
    %1 = vector.shape_cast %0 : vector<1x4x256xf32> to vector<4x256xf32>
    %c0_2 = arith.constant 0 : index
    %c0_3 = arith.constant 0 : index
    %2 = vector.load %arg4[%c0_2, %c0_3] : memref<4x1xf32, #tpu.memory_space<vmem>>, vector<4x1xf32>
    %3 = vector.broadcast %2 : vector<4x1xf32> to vector<4x256xf32>
    %4 = arith.mulf %1, %3 : vector<4x256xf32>
    %c0_4 = arith.constant 0 : index
    %c0_5 = arith.constant 0 : index
    %5 = vector.load %arg5[%c0_4, %c0_5] : memref<4x1xf32, #tpu.memory_space<vmem>>, vector<4x1xf32>
    %6 = vector.broadcast %5 : vector<4x1xf32> to vector<4x256xf32>
    %7 = arith.addf %4, %6 : vector<4x256xf32>
    %cst = arith.constant 0.000000e+00 : f32
    %8 = vector.broadcast %cst : f32 to vector<4x256xf32>
    %9 = arith.maximumf %7, %8 : vector<4x256xf32>
    %c0_6 = arith.constant 0 : index
    %c0_7 = arith.constant 0 : index
    %c0_8 = arith.constant 0 : index
    %10 = vector.load %arg2[%c0_6, %c0_7, %c0_8] : memref<1x4x256xf32, #tpu.memory_space<vmem>>, vector<1x4x256xf32>
    %11 = vector.shape_cast %10 : vector<1x4x256xf32> to vector<4x256xf32>
    %12 = arith.addf %11, %9 : vector<4x256xf32>
    %c0_9 = arith.constant 0 : index
    %c0_10 = arith.constant 0 : index
    %13 = vector.load %arg6[%c0_9, %c0_10] : memref<16x4xf32, #tpu.memory_space<vmem>>, vector<16x4xf32>
    %cst_11 = arith.constant dense<0.000000e+00> : vector<16x256xf32>
    %14 = tpu.matmul %13, %12, %cst_11 {dimension_numbers = #tpu.dot_dimension_numbers<[1], [0], [0], [1], [0, 0, 1, 1], [], []>} : vector<16x4xf32>, vector<4x256xf32>, vector<16x256xf32> -> vector<16x256xf32>
    %c0_12 = arith.constant 0 : index
    %c0_13 = arith.constant 0 : index
    %15 = vector.load %arg7[%c0_12, %c0_13] : memref<16x1xf32, #tpu.memory_space<vmem>>, vector<16x1xf32>
    %16 = vector.broadcast %15 : vector<16x1xf32> to vector<16x256xf32>
    %17 = arith.addf %14, %16 : vector<16x256xf32>
    %c0_14 = arith.constant 0 : index
    %c0_15 = arith.constant 0 : index
    %c0_16 = arith.constant 0 : index
    %18 = vector.load %arg8[%c0_14, %c0_15, %c0_16] : memref<1x16x256xf32, #tpu.memory_space<vmem>>, vector<1x16x256xf32>
    %19 = vector.shape_cast %18 : vector<1x16x256xf32> to vector<16x256xf32>
    %20 = vector.shape_cast %17 : vector<16x256xf32> to vector<1x16x256xf32>
    tpu.vector_store %arg8[%c0_14, %c0_15, %c0_16], %20 {strides = array<i32>} : memref<1x16x256xf32, #tpu.memory_space<vmem>>, vector<1x16x256xf32>,
    return
  }
  func.func @transform_0(%arg0: i32, %arg1: i32) -> (i32, i32, i32) {
    %c0_i32 = arith.constant 0 : i32
    %c0_i32_0 = arith.constant 0 : i32
    return %arg0, %c0_i32, %arg1 : i32, i32, i32
  }
  func.func @transform_1(%arg0: i32, %arg1: i32) -> (i32, i32, i32) {
    %c0_i32 = arith.constant 0 : i32
    %c0_i32_0 = arith.constant 0 : i32
    return %arg0, %c0_i32, %arg1 : i32, i32, i32
  }
  func.func @transform_2(%arg0: i32, %arg1: i32) -> (i32, i32) {
    %c0_i32 = arith.constant 0 : i32
    %c0_i32_0 = arith.constant 0 : i32
    %c0_i32_1 = arith.constant 0 : i32
    return %c0_i32, %c0_i32_0 : i32, i32
  }
  func.func @transform_3(%arg0: i32, %arg1: i32) -> (i32, i32) {
    %c0_i32 = arith.constant 0 : i32
    %c0_i32_0 = arith.constant 0 : i32
    %c0_i32_1 = arith.constant 0 : i32
    return %c0_i32, %c0_i32_0 : i32, i32
  }
  func.func @transform_4(%arg0: i32, %arg1: i32) -> (i32, i32) {
    %c0_i32 = arith.constant 0 : i32
    %c0_i32_0 = arith.constant 0 : i32
    %c0_i32_1 = arith.constant 0 : i32
    return %c0_i32, %c0_i32_0 : i32, i32
  }
  func.func @transform_5(%arg0: i32, %arg1: i32) -> (i32, i32) {
    %c0_i32 = arith.constant 0 : i32
    %c0_i32_0 = arith.constant 0 : i32
    %c0_i32_1 = arith.constant 0 : i32
    return %c0_i32, %c0_i32_0 : i32, i32
  }
  func.func @transform_6(%arg0: i32, %arg1: i32) -> (i32, i32, i32) {
    %c0_i32 = arith.constant 0 : i32
    %c0_i32_0 = arith.constant 0 : i32
    return %arg0, %c0_i32, %arg1 : i32, i32, i32
  }
}

</mosaic_0001>

<llo_original>
// kernel: decoder_block_forward.3
$region0: #{decoder_block_forward.3}
  #allocation0 [shape = 'u32[]', space=smem, size = 0x4, offset = 0x4, fixed_abs, tag = 'smem constant byte address 0x4 - core index']
  #allocation1 [shape = 'u32[72,128]{1,0:T(1,128)}', space=vmem, size = 0x9000, scoped, tag = 'internal scratch']
  %s0 = inlined_call_operand.vmem [shape: f32[2,4,256], index: 0, kind: input, shape index: {}]
  %s1 = inlined_call_operand.vmem [shape: f32[8,36], index: 1, kind: input, shape index: {}]
  %s2 = inlined_call_operand.vmem [shape: f32[9,256], index: 2, kind: input, shape index: {}]
  %s3 = inlined_call_operand.vmem [shape: f32[2,8,256], index: 3, kind: output, shape index: {0}]
  %s4 = inlined_call_operand.vmem [shape: f32[2,16,128], index: 4, kind: output, shape index: {1}]
  %5 = xla_tuple %s3, %s4
  %s6 = sld [smem:[#allocation0]]
  $region53: #{decoder_block_forward.3} parent=0
    _
  %s8 = ssub.s32 1, %s6
  %s9 = scalar_select 0, %s8, %s6
  loop: start=0, step=1, limit=4
  $region2: #{decoder_block_forward.3} parent=0 // loop_pre_header
    _
  $region3: #{decoder_block_forward.3} parent=0 // loop_header
    %s11 = sphi 0, %s15
    %p12 = scmp.ge.s32.totalorder %s11, 4
    %s21 = sphi 0, %s23
    %s24 = sphi 0, %s21
    %s25 = sphi 0, %s24
    %s41 = sphi 0, %s25
    %s45 = sphi 0, %s45
    %s47 = sphi 0, %s45
    %s48 = sphi 0, %s47
    %s62 = sphi 0, %s48
    %s66 = sphi 0, %s66
    %s68 = sphi 0, %s66
    %s69 = sphi 0, %s68
    %s83 = sphi 0, %s69
    %s89 = sphi 0, %s91
    %s92 = sphi 0, %s89
    %s93 = sphi 0, %s92
    %s109 = sphi 0, %s93
    %s115 = sphi 0, %s117
    %s118 = sphi 0, %s115
    %s119 = sphi 0, %s118
    %s135 = sphi 0, %s119
  $region4: #{decoder_block_forward.3} parent=0 // loop_header_branch
    %14 = sbr.rel (%p12) target = $region8
  $region5: #{decoder_block_forward.3} parent=0 // loop_body
    %s16 = ssub.s32 %s11, 1
    %s17 = ssub.s32 %s11, 2
    %s18 = sadd.s32 %s11, 1
    %s19 = ssub.s32 %s11, %s18
    %p20 = scmp.eq.s32.totalorder %s19, 0
    %s22 = sadd.s32 %s21, 1
    %s23 = scalar_select %p20, %s21, %s22
    %p26 = pneg %p20
    %p27 = scmp.eq.s32.totalorder %s11, 1
    %p28 = por %p26, %p27
    %p29 = scmp.ne.s32.totalorder %s21, %s24
    %p30 = scmp.eq.s32.totalorder %s11, 0
    %p31 = por %p29, %p30
    %p32 = scmp.ne.s32.totalorder %s21, %s24
    %p33 = scmp.eq.s32.totalorder %s16, 1
    %p34 = por %p32, %p33
    %p35 = scmp.ne.s32.totalorder %s24, %s25
    %p36 = scmp.eq.s32.totalorder %s16, 0
    %p37 = por %p35, %p36
    %p38 = scmp.ne.s32.totalorder %s24, %s25
    %p39 = scmp.eq.s32.totalorder %s17, 1
    %p40 = por %p38, %p39
    %p42 = scmp.ne.s32.totalorder %s25, %s41
    %p43 = scmp.eq.s32.totalorder %s17, 0
    %p44 = por %p42, %p43
    %s46 = sadd.s32 %s45, 1
    %p49 = scmp.eq.s32.totalorder %s11, 1
    %p50 = scmp.ne.s32.totalorder %s45, %s47
    %p51 = scmp.eq.s32.totalorder %s11, 0
    %p52 = por %p50, %p51
    %p53 = scmp.ne.s32.totalorder %s45, %s47
    %p54 = scmp.eq.s32.totalorder %s16, 1
    %p55 = por %p53, %p54
    %p56 = scmp.ne.s32.totalorder %s47, %s48
    %p57 = scmp.eq.s32.totalorder %s16, 0
    %p58 = por %p56, %p57
    %p59 = scmp.ne.s32.totalorder %s47, %s48
    %p60 = scmp.eq.s32.totalorder %s17, 1
    %p61 = por %p59, %p60
    %p63 = scmp.ne.s32.totalorder %s48, %s62
    %p64 = scmp.eq.s32.totalorder %s17, 0
    %p65 = por %p63, %p64
    %s67 = sadd.s32 %s66, 1
    %p70 = scmp.eq.s32.totalorder %s11, 1
    %p71 = scmp.ne.s32.totalorder %s66, %s68
    %p72 = scmp.eq.s32.totalorder %s11, 0
    %p73 = por %p71, %p72
    %p74 = scmp.ne.s32.totalorder %s66, %s68
    %p75 = scmp.eq.s32.totalorder %s16, 1
    %p76 = por %p74, %p75
    %p77 = scmp.ne.s32.totalorder %s68, %s69
    %p78 = scmp.eq.s32.totalorder %s16, 0
    %p79 = por %p77, %p78
    %p80 = scmp.ne.s32.totalorder %s68, %s69
    %p81 = scmp.eq.s32.totalorder %s17, 1
    %p82 = por %p80, %p81
    %p84 = scmp.ne.s32.totalorder %s69, %s83
    %p85 = scmp.eq.s32.totalorder %s17, 0
    %p86 = por %p84, %p85
    %s87 = ssub.s32 %s11, %s18
    %p88 = scmp.eq.s32.totalorder %s87, 0
    %s90 = sadd.s32 %s89, 1
    %s91 = scalar_select %p88, %s89, %s90
    %p94 = pneg %p88
    %p95 = scmp.eq.s32.totalorder %s11, 1
    %p96 = por %p94, %p95
    %p97 = scmp.ne.s32.totalorder %s89, %s92
    %p98 = scmp.eq.s32.totalorder %s11, 0
    %p99 = por %p97, %p98
    %p100 = scmp.ne.s32.totalorder %s89, %s92
    %p101 = scmp.eq.s32.totalorder %s16, 1
    %p102 = por %p100, %p101
    %p103 = scmp.ne.s32.totalorder %s92, %s93
    %p104 = scmp.eq.s32.totalorder %s16, 0
    %p105 = por %p103, %p104
    %p106 = scmp.ne.s32.totalorder %s92, %s93
    %p107 = scmp.eq.s32.totalorder %s17, 1
    %p108 = por %p106, %p107
    %p110 = scmp.ne.s32.totalorder %s93, %s109
    %p111 = scmp.eq.s32.totalorder %s17, 0
    %p112 = por %p110, %p111
    %s113 = ssub.s32 %s11, %s18
    %p114 = scmp.eq.s32.totalorder %s113, 0
    %s116 = sadd.s32 %s115, 1
    %s117 = scalar_select %p114, %s115, %s116
    %p120 = pneg %p114
    %p121 = scmp.eq.s32.totalorder %s11, 1
    %p122 = por %p120, %p121
    %p123 = scmp.ne.s32.totalorder %s115, %s118
    %p124 = scmp.eq.s32.totalorder %s11, 0
    %p125 = por %p123, %p124
    %p126 = scmp.ne.s32.totalorder %s115, %s118
    %p127 = scmp.eq.s32.totalorder %s16, 1
    %p128 = por %p126, %p127
    %p129 = scmp.ne.s32.totalorder %s118, %s119
    %p130 = scmp.eq.s32.totalorder %s16, 0
    %p131 = por %p129, %p130
    %p132 = scmp.ne.s32.totalorder %s118, %s119
    %p133 = scmp.eq.s32.totalorder %s17, 1
    %p134 = por %p132, %p133
    %p136 = scmp.ne.s32.totalorder %s119, %s135
    %p137 = scmp.eq.s32.totalorder %s17, 0
    %p138 = por %p136, %p137
    %p139 = scmp.le.s32.totalorder 1, %s11
    %p140 = scmp.lt.s32.totalorder %s11, 3
    %p141 = pnand %p139, %p140
    %p142 = pneg %p141
    // Predicated region
    $region9: #{decoder_block_forward.3} parent=5 // pred_check
      _
    $region10: #{decoder_block_forward.3} parent=5 // pred_check_branch
      %144 = sbr.rel (%p141) target = $region12
    $region11: #{decoder_block_forward.3} parent=5 // pred_region
      %s145 = ssub.s32 %s11, 1
      // Predicated region
      $region13: #{decoder_block_forward.3} parent=11 // pred_check
        %p146 = pneg %p58
      $region14: #{decoder_block_forward.3} parent=11 // pred_check_branch
        %148 = sbr.rel (%p146) target = $region16
      $region15: #{decoder_block_forward.3} parent=11 // pred_region
        _
      $region16: #{decoder_block_forward.3} parent=11 // pred_fallthru
        _
      // Predicated region
      $region17: #{decoder_block_forward.3} parent=11 // pred_check
        %p149 = pneg %p79
      $region18: #{decoder_block_forward.3} parent=11 // pred_check_branch
        %151 = sbr.rel (%p149) target = $region20
      $region19: #{decoder_block_forward.3} parent=11 // pred_region
        _
      $region20: #{decoder_block_forward.3} parent=11 // pred_fallthru
        _
    $region12: #{decoder_block_forward.3} parent=5 // pred_fallthru
      _
    %p152 = scmp.lt.s32.totalorder %s11, 2
    // Predicated region
    $region21: #{decoder_block_forward.3} parent=5 // pred_check
      %p153 = pneg %p152
    $region22: #{decoder_block_forward.3} parent=5 // pred_check_branch
      %155 = sbr.rel (%p153) target = $region24
    $region23: #{decoder_block_forward.3} parent=5 // pred_region
      // Predicated region
      $region25: #{decoder_block_forward.3} parent=23 // pred_check
        %p156 = pneg %p31
      $region26: #{decoder_block_forward.3} parent=23 // pred_check_branch
        %158 = sbr.rel (%p156) target = $region28
      $region27: #{decoder_block_forward.3} parent=23 // pred_region
        %p159 = scmp.lt.s32.totalorder %s11, 1
        %s160 = scalar_select %p159, %s11, 1
        %s161 = smul.addr %s160, 2
        %s162 = smul.addr %s161, 4
        %s163 = scalar_lea.vmem %s0, %s162
      $region28: #{decoder_block_forward.3} parent=23 // pred_fallthru
        _
    $region24: #{decoder_block_forward.3} parent=5 // pred_fallthru
      _
    %p164 = scmp.le.s32.totalorder 1, %s11
    %p165 = scmp.lt.s32.totalorder %s11, 3
    %p166 = pnand %p164, %p165
    %p167 = pneg %p166
    // Predicated region
    $region29: #{decoder_block_forward.3} parent=5 // pred_check
      _
    $region30: #{decoder_block_forward.3} parent=5 // pred_check_branch
      %169 = sbr.rel (%p166) target = $region32
    $region31: #{decoder_block_forward.3} parent=5 // pred_region
      %s170 = ssub.s32 %s11, 1
      %p171 = scmp.lt.s32.totalorder %s16, 1
      %s172 = scalar_select %p171, %s16, 1
      %s173 = smul.addr %s172, 2
      %s174 = smul.addr %s173, 4
      %s175 = scalar_lea.vmem %s0, %s174
      %p176 = pneg %p37
      %p177 = pneg %p34
      %p178 = pneg %p58
      %p179 = pneg %p55
      %p180 = pneg %p79
      %p181 = pneg %p76
      %p182 = pneg %p105
      %p183 = pneg %p102
      %p184 = scmp.lt.s32.totalorder %s16, 1
      %s185 = scalar_select %p184, %s16, 1
      %s186 = smul.addr %s185, 2
      %s187 = smul.addr %s186, 8
      %s188 = scalar_lea.vmem %s3, %s187
      %p189 = pneg %p131
      %p190 = pneg %p128
      %p191 = scmp.lt.s32.totalorder %s16, 1
      %s192 = scalar_select %p191, %s16, 1
      %s193 = smul.addr %s192, 2
      %s194 = smul.addr %s193, 8
      %s195 = scalar_lea.vmem %s4, %s194
      %p196 = scmp.lt.s32.totalorder %s16, 1
      %s197 = scalar_select %p196, %s16, 1
      %s198 = smul.addr %s197, 2
      %s199 = smul.addr %s198, 4
      %s200 = scalar_lea.vmem %s0, %s199
      %p201 = scmp.lt.s32.totalorder %s16, 1
      %s202 = scalar_select %p201, %s16, 1
      %s203 = smul.addr %s202, 2
      %s204 = smul.addr %s203, 8
      %s205 = scalar_lea.vmem %s3, %s204
      %p206 = scmp.lt.s32.totalorder %s16, 1
      %s207 = scalar_select %p206, %s16, 1
      %s208 = smul.addr %s207, 2
      %s209 = smul.addr %s208, 8
      %s210 = scalar_lea.vmem %s4, %s209
      %v211 = vld [vmem:[%s200] sm:$0xff]
      %213 = vst [vmem:[#allocation1] ss:$2 sm:$0xff] %v211
      %v214 = vld.sshfl [vmem:[#allocation1] sm:$0xff pattern:$0x75316420]
      %v215 = vld.sshfl [vmem:[#allocation1 + $0x8] sm:$0xff pattern:$0x75316420]
      %218 = vrot.lane.b32.xlu0 %v214, 17
      %v219 = vpop.permute.xlu0 %218
      %220 = vrot.lane.b32.xlu0 %v215, 17
      %v221 = vpop.permute.xlu0 %220
      %v222 = vlaneseq
      %v223 = vand.u32 %v222, 127
      %vm224 = vcmp.lt.s32.totalorder %v223, 17
      %v225 = vsel %vm224, %v219, %v221
      %v226 = vsel %vm224, %v221, %v219
      %v227 = vld [vmem:[%s2] ss:$8 sm:$0x3]
      %v229 = vperm.slane %v227, 0
      %v230 = vperm.slane %v227, 1
      %v233 = vmul.f32 %v226, %v229
      %v234 = vmul.f32 %v225, %v230
      %235 = vst [vmem:[#allocation1] ss:$2 sm:$0xff] %v211
      %v236 = vld.sshfl [vmem:[#allocation1] sm:$0xff pattern:$0x75316420]
      %v237 = vld.sshfl [vmem:[#allocation1 + $0x8] sm:$0xff pattern:$0x75316420]
      %240 = vrot.lane.b32.xlu0 %v236, 16
      %v241 = vpop.permute.xlu0 %240
      %242 = vrot.lane.b32.xlu0 %v237, 16
      %v243 = vpop.permute.xlu0 %242
      %vm244 = vcmp.lt.s32.totalorder %v223, 16
      %v245 = vsel %vm244, %v241, %v243
      %v246 = vsel %vm244, %v243, %v241
      %s247 = scalar_lea.vmem %s2, 1
      %v248 = vld [vmem:[%s247] ss:$8 sm:$0x3]
      %v250 = vperm.slane %v248, 0
      %v251 = vperm.slane %v248, 1
      %v254 = vmul.f32 %v246, %v250
      %v255 = vmul.f32 %v245, %v251
      %256 = vst [vmem:[#allocation1] ss:$2 sm:$0xff] %v211
      %v257 = vld.sshfl [vmem:[#allocation1] sm:$0xff pattern:$0x75316420]
      %v258 = vld.sshfl [vmem:[#allocation1 + $0x8] sm:$0xff pattern:$0x75316420]
      %261 = vrot.lane.b32.xlu0 %v257, 15
      %v262 = vpop.permute.xlu0 %261
      %263 = vrot.lane.b32.xlu0 %v258, 15
      %v264 = vpop.permute.xlu0 %263
      %vm265 = vcmp.lt.s32.totalorder %v223, 15
      %v266 = vsel %vm265, %v262, %v264
      %v267 = vsel %vm265, %v264, %v262
      %s268 = scalar_lea.vmem %s2, 2
      %v269 = vld [vmem:[%s268] ss:$8 sm:$0x3]
      %v271 = vperm.slane %v269, 0
      %v272 = vperm.slane %v269, 1
      %v275 = vmul.f32 %v267, %v271
      %v276 = vmul.f32 %v266, %v272
      %277 = vst [vmem:[#allocation1] ss:$2 sm:$0xff] %v211
      %v278 = vld.sshfl [vmem:[#allocation1] sm:$0xff pattern:$0x75316420]
      %v279 = vld.sshfl [vmem:[#allocation1 + $0x8] sm:$0xff pattern:$0x75316420]
      %282 = vrot.lane.b32.xlu0 %v278, 1
      %v283 = vpop.permute.xlu0 %282
      %284 = vrot.lane.b32.xlu0 %v279, 1
      %v285 = vpop.permute.xlu0 %284
      %vm286 = vcmp.lt.s32.totalorder %v223, 1
      %v287 = vsel %vm286, %v283, %v285
      %v288 = vsel %vm286, %v285, %v283
      %s289 = scalar_lea.vmem %s2, 3
      %v290 = vld [vmem:[%s289] ss:$8 sm:$0x3]
      %v292 = vperm.slane %v290, 0
      %v293 = vperm.slane %v290, 1
      %v296 = vmul.f32 %v288, %v292
      %v297 = vmul.f32 %v287, %v293
      %298 = vst [vmem:[#allocation1] ss:$2 sm:$0xff] %v211
      %v299 = vld.sshfl [vmem:[#allocation1] sm:$0xff pattern:$0x75316420]
      %v300 = vld.sshfl [vmem:[#allocation1 + $0x8] sm:$0xff pattern:$0x75316420]
      %303 = vrot.lane.b32.xlu0 %v299, 127
      %v304 = vpop.permute.xlu0 %303
      %305 = vrot.lane.b32.xlu0 %v300, 127
      %v306 = vpop.permute.xlu0 %305
      %vm307 = vcmp.lt.s32.totalorder %v223, 127
      %v308 = vsel %vm307, %v304, %v306
      %v309 = vsel %vm307, %v306, %v304
      %s310 = scalar_lea.vmem %s2, 5
      %v311 = vld [vmem:[%s310] ss:$8 sm:$0x3]
      %v313 = vperm.slane %v311, 0
      %v314 = vperm.slane %v311, 1
      %v317 = vmul.f32 %v308, %v313
      %v318 = vmul.f32 %v309, %v314
      %319 = vst [vmem:[#allocation1] ss:$2 sm:$0xff] %v211
      %v320 = vld.sshfl [vmem:[#allocation1] sm:$0xff pattern:$0x75316420]
      %v321 = vld.sshfl [vmem:[#allocation1 + $0x8] sm:$0xff pattern:$0x75316420]
      %324 = vrot.lane.b32.xlu0 %v320, 113
      %v325 = vpop.permute.xlu0 %324
      %326 = vrot.lane.b32.xlu0 %v321, 113
      %v327 = vpop.permute.xlu0 %326
      %vm328 = vcmp.lt.s32.totalorder %v223, 113
      %v329 = vsel %vm328, %v325, %v327
      %v330 = vsel %vm328, %v327, %v325
      %s331 = scalar_lea.vmem %s2, 6
      %v332 = vld [vmem:[%s331] ss:$8 sm:$0x3]
      %v334 = vperm.slane %v332, 0
      %v335 = vperm.slane %v332, 1
      %v338 = vmul.f32 %v329, %v334
      %v339 = vmul.f32 %v330, %v335
      %340 = vst [vmem:[#allocation1] ss:$2 sm:$0xff] %v211
      %v341 = vld.sshfl [vmem:[#allocation1] sm:$0xff pattern:$0x75316420]
      %v342 = vld.sshfl [vmem:[#allocation1 + $0x8] sm:$0xff pattern:$0x75316420]
      %345 = vrot.lane.b32.xlu0 %v341, 112
      %v346 = vpop.permute.xlu0 %345
      %347 = vrot.lane.b32.xlu0 %v342, 112
      %v348 = vpop.permute.xlu0 %347
      %vm349 = vcmp.lt.s32.totalorder %v223, 112
      %v350 = vsel %vm349, %v346, %v348
      %v351 = vsel %vm349, %v348, %v346
      %s352 = scalar_lea.vmem %s2, 7
      %v353 = vld [vmem:[%s352] ss:$8 sm:$0x3]
      %v355 = vperm.slane %v353, 0
      %v356 = vperm.slane %v353, 1
      %v359 = vmul.f32 %v350, %v355
      %v360 = vmul.f32 %v351, %v356
      %361 = vst [vmem:[#allocation1] ss:$2 sm:$0xff] %v211
      %v362 = vld.sshfl [vmem:[#allocation1] sm:$0xff pattern:$0x75316420]
      %v363 = vld.sshfl [vmem:[#allocation1 + $0x8] sm:$0xff pattern:$0x75316420]
      %366 = vrot.lane.b32.xlu0 %v362, 111
      %v367 = vpop.permute.xlu0 %366
      %368 = vrot.lane.b32.xlu0 %v363, 111
      %v369 = vpop.permute.xlu0 %368
      %vm370 = vcmp.lt.s32.totalorder %v223, 111
      %v371 = vsel %vm370, %v367, %v369
      %v372 = vsel %vm370, %v369, %v367
      %s373 = scalar_lea.vmem %s2, 16
      %v374 = vld [vmem:[%s373] ss:$8 sm:$0x3]
      %v376 = vperm.slane %v374, 0
      %v377 = vperm.slane %v374, 1
      %v380 = vmul.f32 %v371, %v376
      %v381 = vmul.f32 %v372, %v377
      %v384 = vrot.slane %v254, 4
      %v385 = vrot.slane %v255, 4
      %v390 = vrot.slane %v296, 4
      %v391 = vrot.slane %v297, 4
      %394 = vst [vmem:[#allocation1] ss:$2 sm:$0xff] %v211
      %v395 = vld.sshfl [vmem:[#allocation1] sm:$0xff pattern:$0x75316420]
      %v396 = vld.sshfl [vmem:[#allocation1 + $0x8] sm:$0xff pattern:$0x75316420]
      %v401 = vrot.slane %v317, 4
      %v402 = vrot.slane %v318, 4
      %v407 = vrot.slane %v359, 4
      %v408 = vrot.slane %v360, 4
      %vm411 = vcmask 1043456
      %v412 = vsel %vm411, %v233, %v384
      %v413 = vsel %vm411, %v234, %v385
      %v414 = vsel %vm411, %v275, %v390
      %v415 = vsel %vm411, %v276, %v391
      %v416 = vsel %vm411, %v395, %v401
      %v417 = vsel %vm411, %v396, %v402
      %v418 = vsel %vm411, %v338, %v407
      %v419 = vsel %vm411, %v339, %v408
      %v420 = vld [vmem:[%s1] sm:$0xff]
      %vm421 = vcmask 293888
      %v423 = vsel %vm421, %v420, 0
      %v426 = vsel %vm411, %v380, 0
      %v429 = vsel %vm411, %v381, 0
      %431 = vmatpush.msra.mxu0 0.0
      %432 = vmatpush.msra.mxu0 0.0
      %433 = vmatpush.msra.mxu0 0.0
      %434 = vmatpush.msra.mxu0 0.0
      %435 = vmatpush.msra.mxu0 0.0
      %436 = vmatpush.msra.mxu0 0.0
      %437 = vmatpush.msra.mxu0 0.0
      %438 = vmatpush.msra.mxu0 0.0
      %439 = vmatpush.msra.mxu0 0.0
      %440 = vmatpush.msra.mxu0 0.0
      %441 = vmatpush.msra.mxu0 0.0
      %442 = vmatpush.msra.mxu0 %v426
      %443 = vmatpush.msra.mxu0 %v418
      %444 = vmatpush.msra.mxu0 %v416
      %445 = vmatpush.msra.mxu0 %v414
      %446 = vmatpush.msra.mxu0 %v412
      %447 = vmatmul.f32.gmra.mxu0 %v423
      %v448 = vpop.f32.mrf.mxu0
      %v449 = vadd.f32 0.0, %v448
      %450 = vdwg.mxu0
      %451 = vmatpush.msra.mxu0 0.0
      %452 = vmatpush.msra.mxu0 0.0
      %453 = vmatpush.msra.mxu0 0.0
      %454 = vmatpush.msra.mxu0 0.0
      %455 = vmatpush.msra.mxu0 0.0
      %456 = vmatpush.msra.mxu0 0.0
      %457 = vmatpush.msra.mxu0 0.0
      %458 = vmatpush.msra.mxu0 0.0
      %459 = vmatpush.msra.mxu0 0.0
      %460 = vmatpush.msra.mxu0 0.0
      %461 = vmatpush.msra.mxu0 0.0
      %462 = vmatpush.msra.mxu0 %v429
      %463 = vmatpush.msra.mxu0 %v419
      %464 = vmatpush.msra.mxu0 %v417
      %465 = vmatpush.msra.mxu0 %v415
      %466 = vmatpush.msra.mxu0 %v413
      %467 = vmatmul.f32.gmra.mxu0 %v423
      %v468 = vpop.f32.mrf.mxu0
      %v469 = vadd.f32 0.0, %v468
      %470 = vdwg.mxu0
      %471 = vst [vmem:[%s205] sm:$0xff] %v449
      %472 = vst [vmem:[%s205 + $0x8] sm:$0xff] %v469
      %v473 = vadd.f32 %v449, %v469
      %474 = vadd.xlane.f32.xlu0 %v473
      %v475 = vpop.xlane.xlu0 %474
      %v476 = vmul.f32 %v449, %v449
      %v477 = vmul.f32 %v469, %v469
      %v478 = vadd.f32 %v476, %v477
      %479 = vadd.xlane.f32.xlu0 %v478
      %v480 = vpop.xlane.xlu0 %479
      %482 = vset.pattern.permute.xlu0 0
      %483 = vperm.xlu0 %482, %v475
      %v484 = vpop.permute.xlu0 %483
      %487 = vset.pattern.permute.xlu0 0
      %488 = vperm.xlu0 %487, %v480
      %v489 = vpop.permute.xlu0 %488
      %491 = vst [vmem:[%s210] sm:$0xff] %v484
      %492 = vst [vmem:[%s210 + $0x8] sm:$0xff] %v489
      %p493 = scmp.lt.s32.totalorder %s16, 1
      %s494 = scalar_select %p493, %s16, 1
      %s495 = smul.addr %s494, 2
      %s496 = smul.addr %s495, 8
      %s497 = scalar_lea.vmem %s3, %s496
      %p498 = scmp.lt.s32.totalorder %s16, 1
      %s499 = scalar_select %p498, %s16, 1
      %s500 = smul.addr %s499, 2
      %s501 = smul.addr %s500, 8
      %s502 = scalar_lea.vmem %s4, %s501
      // Predicated region
      $region33: #{decoder_block_forward.3} parent=31 // pred_check
        %p503 = pneg %p102
      $region34: #{decoder_block_forward.3} parent=31 // pred_check_branch
        %505 = sbr.rel (%p503) target = $region36
      $region35: #{decoder_block_forward.3} parent=31 // pred_region
        _
      $region36: #{decoder_block_forward.3} parent=31 // pred_fallthru
        _
      // Predicated region
      $region37: #{decoder_block_forward.3} parent=31 // pred_check
        %p506 = pneg %p128
      $region38: #{decoder_block_forward.3} parent=31 // pred_check_branch
        %508 = sbr.rel (%p506) target = $region40
      $region39: #{decoder_block_forward.3} parent=31 // pred_region
        _
      $region40: #{decoder_block_forward.3} parent=31 // pred_fallthru
        _
    $region32: #{decoder_block_forward.3} parent=5 // pred_fallthru
      _
    %p509 = scmp.le.s32.totalorder 2, %s11
    // Predicated region
    $region41: #{decoder_block_forward.3} parent=5 // pred_check
      %p510 = pneg %p509
    $region42: #{decoder_block_forward.3} parent=5 // pred_check_branch
      %512 = sbr.rel (%p510) target = $region44
    $region43: #{decoder_block_forward.3} parent=5 // pred_region
      %s513 = ssub.s32 %s11, 2
      // Predicated region
      $region45: #{decoder_block_forward.3} parent=43 // pred_check
        %p514 = pneg %p108
      $region46: #{decoder_block_forward.3} parent=43 // pred_check_branch
        %516 = sbr.rel (%p514) target = $region48
      $region47: #{decoder_block_forward.3} parent=43 // pred_region
        %p517 = scmp.lt.s32.totalorder %s17, 1
        %s518 = scalar_select %p517, %s17, 1
        %s519 = smul.addr %s518, 2
        %s520 = smul.addr %s519, 8
        %s521 = scalar_lea.vmem %s3, %s520
      $region48: #{decoder_block_forward.3} parent=43 // pred_fallthru
        _
      // Predicated region
      $region49: #{decoder_block_forward.3} parent=43 // pred_check
        %p522 = pneg %p134
      $region50: #{decoder_block_forward.3} parent=43 // pred_check_branch
        %524 = sbr.rel (%p522) target = $region52
      $region51: #{decoder_block_forward.3} parent=43 // pred_region
        %p525 = scmp.lt.s32.totalorder %s17, 1
        %s526 = scalar_select %p525, %s17, 1
        %s527 = smul.addr %s526, 2
        %s528 = smul.addr %s527, 8
        %s529 = scalar_lea.vmem %s4, %s528
      $region52: #{decoder_block_forward.3} parent=43 // pred_fallthru
        _
    $region44: #{decoder_block_forward.3} parent=5 // pred_fallthru
      _
  $region6: #{decoder_block_forward.3} parent=0 // loop_footer
    %s15 = sadd.s32 1, %s11
  $region7: #{decoder_block_forward.3} parent=0 // loop_footer_branch
    %10 = sbr.rel target = $region3
  $region8: #{decoder_block_forward.3} parent=0 // loop_exit
    _

// kernel: decoder_block_forward.5
$region0: #{decoder_block_forward.5}
  #allocation0 [shape = 'u32[]', space=smem, size = 0x4, offset = 0x4, fixed_abs, tag = 'smem constant byte address 0x4 - core index']
  #allocation1 [shape = 'u32[72,128]{1,0:T(1,128)}', space=vmem, size = 0x9000, scoped, tag = 'internal scratch']
  %s0 = inlined_call_operand.vmem [shape: f32[2,4,256], index: 0, kind: input, shape index: {}]
  %s1 = inlined_call_operand.vmem [shape: f32[2,4,256], index: 1, kind: input, shape index: {}]
  %s2 = inlined_call_operand.vmem [shape: f32[4,1], index: 2, kind: input, shape index: {}]
  %s3 = inlined_call_operand.vmem [shape: f32[4,1], index: 3, kind: input, shape index: {}]
  %s4 = inlined_call_operand.vmem [shape: f32[16,4], index: 4, kind: input, shape index: {}]
  %s5 = inlined_call_operand.vmem [shape: f32[16,1], index: 5, kind: input, shape index: {}]
  %s6 = inlined_call_operand.vmem [shape: f32[2,16,256], index: 6, kind: output, shape index: {}]
  %s7 = sld [smem:[#allocation0]]
  $region57: #{decoder_block_forward.5} parent=0
    _
  %s9 = ssub.s32 1, %s7
  %s10 = scalar_select 0, %s9, %s7
  loop: start=0, step=1, limit=4
  $region2: #{decoder_block_forward.5} parent=0 // loop_pre_header
    _
  $region3: #{decoder_block_forward.5} parent=0 // loop_header
    %s12 = sphi 0, %s16
    %p13 = scmp.ge.s32.totalorder %s12, 4
    %s19 = sphi 0, %s31
    %s20 = sphi 0, %s27
    %s21 = sphi 0, %s19
    %s22 = sphi 0, %s20
    %s23 = sphi 0, %s21
    %s24 = sphi 0, %s22
    %s36 = sphi 0, %s38
    %s39 = sphi 0, %s36
    %s40 = sphi 0, %s39
    %s56 = sphi 0, %s40
    %s64 = sphi 0, %s66
    %s67 = sphi 0, %s64
    %s68 = sphi 0, %s67
    %s84 = sphi 0, %s68
    %s88 = sphi 0, %s88
    %s90 = sphi 0, %s88
    %s91 = sphi 0, %s90
    %s105 = sphi 0, %s91
    %s109 = sphi 0, %s109
    %s111 = sphi 0, %s109
    %s112 = sphi 0, %s111
    %s126 = sphi 0, %s112
    %s130 = sphi 0, %s130
    %s132 = sphi 0, %s130
    %s133 = sphi 0, %s132
    %s147 = sphi 0, %s133
    %s151 = sphi 0, %s151
    %s153 = sphi 0, %s151
    %s154 = sphi 0, %s153
    %s168 = sphi 0, %s154
    %s176 = sphi 0, %s178
    %s179 = sphi 0, %s176
    %s180 = sphi 0, %s179
    %s196 = sphi 0, %s180
  $region4: #{decoder_block_forward.5} parent=0 // loop_header_branch
    %15 = sbr.rel (%p13) target = $region8
  $region5: #{decoder_block_forward.5} parent=0 // loop_body
    %s17 = ssub.s32 %s12, 1
    %s18 = ssub.s32 %s12, 2
    %s25 = sadd.s32 1, %s20
    %p26 = scmp.ge.s32.totalorder %s25, 1
    %s27 = scalar_select %p26, 0, %s25
    %s28 = sadd.s32 1, %s19
    %s29 = scalar_select %p26, %s28, %s19
    %p30 = scmp.ge.s32.totalorder %s29, 2
    %s31 = scalar_select %p30, 0, %s29
    %s32 = ssub.s32 %s19, %s31
    %s33 = ssub.s32 %s20, %s27
    %s34 = sor.u32 %s32, %s33
    %p35 = scmp.eq.s32.totalorder %s34, 0
    %s37 = sadd.s32 %s36, 1
    %s38 = scalar_select %p35, %s36, %s37
    %p41 = pneg %p35
    %p42 = scmp.eq.s32.totalorder %s12, 1
    %p43 = por %p41, %p42
    %p44 = scmp.ne.s32.totalorder %s36, %s39
    %p45 = scmp.eq.s32.totalorder %s12, 0
    %p46 = por %p44, %p45
    %p47 = scmp.ne.s32.totalorder %s36, %s39
    %p48 = scmp.eq.s32.totalorder %s17, 1
    %p49 = por %p47, %p48
    %p50 = scmp.ne.s32.totalorder %s39, %s40
    %p51 = scmp.eq.s32.totalorder %s17, 0
    %p52 = por %p50, %p51
    %p53 = scmp.ne.s32.totalorder %s39, %s40
    %p54 = scmp.eq.s32.totalorder %s18, 1
    %p55 = por %p53, %p54
    %p57 = scmp.ne.s32.totalorder %s40, %s56
    %p58 = scmp.eq.s32.totalorder %s18, 0
    %p59 = por %p57, %p58
    %s60 = ssub.s32 %s19, %s31
    %s61 = ssub.s32 %s20, %s27
    %s62 = sor.u32 %s60, %s61
    %p63 = scmp.eq.s32.totalorder %s62, 0
    %s65 = sadd.s32 %s64, 1
    %s66 = scalar_select %p63, %s64, %s65
    %p69 = pneg %p63
    %p70 = scmp.eq.s32.totalorder %s12, 1
    %p71 = por %p69, %p70
    %p72 = scmp.ne.s32.totalorder %s64, %s67
    %p73 = scmp.eq.s32.totalorder %s12, 0
    %p74 = por %p72, %p73
    %p75 = scmp.ne.s32.totalorder %s64, %s67
    %p76 = scmp.eq.s32.totalorder %s17, 1
    %p77 = por %p75, %p76
    %p78 = scmp.ne.s32.totalorder %s67, %s68
    %p79 = scmp.eq.s32.totalorder %s17, 0
    %p80 = por %p78, %p79
    %p81 = scmp.ne.s32.totalorder %s67, %s68
    %p82 = scmp.eq.s32.totalorder %s18, 1
    %p83 = por %p81, %p82
    %p85 = scmp.ne.s32.totalorder %s68, %s84
    %p86 = scmp.eq.s32.totalorder %s18, 0
    %p87 = por %p85, %p86
    %s89 = sadd.s32 %s88, 1
    %p92 = scmp.eq.s32.totalorder %s12, 1
    %p93 = scmp.ne.s32.totalorder %s88, %s90
    %p94 = scmp.eq.s32.totalorder %s12, 0
    %p95 = por %p93, %p94
    %p96 = scmp.ne.s32.totalorder %s88, %s90
    %p97 = scmp.eq.s32.totalorder %s17, 1
    %p98 = por %p96, %p97
    %p99 = scmp.ne.s32.totalorder %s90, %s91
    %p100 = scmp.eq.s32.totalorder %s17, 0
    %p101 = por %p99, %p100
    %p102 = scmp.ne.s32.totalorder %s90, %s91
    %p103 = scmp.eq.s32.totalorder %s18, 1
    %p104 = por %p102, %p103
    %p106 = scmp.ne.s32.totalorder %s91, %s105
    %p107 = scmp.eq.s32.totalorder %s18, 0
    %p108 = por %p106, %p107
    %s110 = sadd.s32 %s109, 1
    %p113 = scmp.eq.s32.totalorder %s12, 1
    %p114 = scmp.ne.s32.totalorder %s109, %s111
    %p115 = scmp.eq.s32.totalorder %s12, 0
    %p116 = por %p114, %p115
    %p117 = scmp.ne.s32.totalorder %s109, %s111
    %p118 = scmp.eq.s32.totalorder %s17, 1
    %p119 = por %p117, %p118
    %p120 = scmp.ne.s32.totalorder %s111, %s112
    %p121 = scmp.eq.s32.totalorder %s17, 0
    %p122 = por %p120, %p121
    %p123 = scmp.ne.s32.totalorder %s111, %s112
    %p124 = scmp.eq.s32.totalorder %s18, 1
    %p125 = por %p123, %p124
    %p127 = scmp.ne.s32.totalorder %s112, %s126
    %p128 = scmp.eq.s32.totalorder %s18, 0
    %p129 = por %p127, %p128
    %s131 = sadd.s32 %s130, 1
    %p134 = scmp.eq.s32.totalorder %s12, 1
    %p135 = scmp.ne.s32.totalorder %s130, %s132
    %p136 = scmp.eq.s32.totalorder %s12, 0
    %p137 = por %p135, %p136
    %p138 = scmp.ne.s32.totalorder %s130, %s132
    %p139 = scmp.eq.s32.totalorder %s17, 1
    %p140 = por %p138, %p139
    %p141 = scmp.ne.s32.totalorder %s132, %s133
    %p142 = scmp.eq.s32.totalorder %s17, 0
    %p143 = por %p141, %p142
    %p144 = scmp.ne.s32.totalorder %s132, %s133
    %p145 = scmp.eq.s32.totalorder %s18, 1
    %p146 = por %p144, %p145
    %p148 = scmp.ne.s32.totalorder %s133, %s147
    %p149 = scmp.eq.s32.totalorder %s18, 0
    %p150 = por %p148, %p149
    %s152 = sadd.s32 %s151, 1
    %p155 = scmp.eq.s32.totalorder %s12, 1
    %p156 = scmp.ne.s32.totalorder %s151, %s153
    %p157 = scmp.eq.s32.totalorder %s12, 0
    %p158 = por %p156, %p157
    %p159 = scmp.ne.s32.totalorder %s151, %s153
    %p160 = scmp.eq.s32.totalorder %s17, 1
    %p161 = por %p159, %p160
    %p162 = scmp.ne.s32.totalorder %s153, %s154
    %p163 = scmp.eq.s32.totalorder %s17, 0
    %p164 = por %p162, %p163
    %p165 = scmp.ne.s32.totalorder %s153, %s154
    %p166 = scmp.eq.s32.totalorder %s18, 1
    %p167 = por %p165, %p166
    %p169 = scmp.ne.s32.totalorder %s154, %s168
    %p170 = scmp.eq.s32.totalorder %s18, 0
    %p171 = por %p169, %p170
    %s172 = ssub.s32 %s19, %s31
    %s173 = ssub.s32 %s20, %s27
    %s174 = sor.u32 %s172, %s173
    %p175 = scmp.eq.s32.totalorder %s174, 0
    %s177 = sadd.s32 %s176, 1
    %s178 = scalar_select %p175, %s176, %s177
    %p181 = pneg %p175
    %p182 = scmp.eq.s32.totalorder %s12, 1
    %p183 = por %p181, %p182
    %p184 = scmp.ne.s32.totalorder %s176, %s179
    %p185 = scmp.eq.s32.totalorder %s12, 0
    %p186 = por %p184, %p185
    %p187 = scmp.ne.s32.totalorder %s176, %s179
    %p188 = scmp.eq.s32.totalorder %s17, 1
    %p189 = por %p187, %p188
    %p190 = scmp.ne.s32.totalorder %s179, %s180
    %p191 = scmp.eq.s32.totalorder %s17, 0
    %p192 = por %p190, %p191
    %p193 = scmp.ne.s32.totalorder %s179, %s180
    %p194 = scmp.eq.s32.totalorder %s18, 1
    %p195 = por %p193, %p194
    %p197 = scmp.ne.s32.totalorder %s180, %s196
    %p198 = scmp.eq.s32.totalorder %s18, 0
    %p199 = por %p197, %p198
    %p200 = scmp.le.s32.totalorder 1, %s12
    %p201 = scmp.lt.s32.totalorder %s12, 3
    %p202 = pnand %p200, %p201
    %p203 = pneg %p202
    // Predicated region
    $region9: #{decoder_block_forward.5} parent=5 // pred_check
      _
    $region10: #{decoder_block_forward.5} parent=5 // pred_check_branch
      %205 = sbr.rel (%p202) target = $region12
    $region11: #{decoder_block_forward.5} parent=5 // pred_region
      %s206 = ssub.s32 %s12, 1
      // Predicated region
      $region13: #{decoder_block_forward.5} parent=11 // pred_check
        %p207 = pneg %p101
      $region14: #{decoder_block_forward.5} parent=11 // pred_check_branch
        %209 = sbr.rel (%p207) target = $region16
      $region15: #{decoder_block_forward.5} parent=11 // pred_region
        _
      $region16: #{decoder_block_forward.5} parent=11 // pred_fallthru
        _
      // Predicated region
      $region17: #{decoder_block_forward.5} parent=11 // pred_check
        %p210 = pneg %p122
      $region18: #{decoder_block_forward.5} parent=11 // pred_check_branch
        %212 = sbr.rel (%p210) target = $region20
      $region19: #{decoder_block_forward.5} parent=11 // pred_region
        _
      $region20: #{decoder_block_forward.5} parent=11 // pred_fallthru
        _
      // Predicated region
      $region21: #{decoder_block_forward.5} parent=11 // pred_check
        %p213 = pneg %p143
      $region22: #{decoder_block_forward.5} parent=11 // pred_check_branch
        %215 = sbr.rel (%p213) target = $region24
      $region23: #{decoder_block_forward.5} parent=11 // pred_region
        _
      $region24: #{decoder_block_forward.5} parent=11 // pred_fallthru
        _
      // Predicated region
      $region25: #{decoder_block_forward.5} parent=11 // pred_check
        %p216 = pneg %p164
      $region26: #{decoder_block_forward.5} parent=11 // pred_check_branch
        %218 = sbr.rel (%p216) target = $region28
      $region27: #{decoder_block_forward.5} parent=11 // pred_region
        _
      $region28: #{decoder_block_forward.5} parent=11 // pred_fallthru
        _
    $region12: #{decoder_block_forward.5} parent=5 // pred_fallthru
      _
    %p219 = scmp.lt.s32.totalorder %s12, 2
    // Predicated region
    $region29: #{decoder_block_forward.5} parent=5 // pred_check
      %p220 = pneg %p219
    $region30: #{decoder_block_forward.5} parent=5 // pred_check_branch
      %222 = sbr.rel (%p220) target = $region32
    $region31: #{decoder_block_forward.5} parent=5 // pred_region
      // Predicated region
      $region33: #{decoder_block_forward.5} parent=31 // pred_check
        %p223 = pneg %p46
      $region34: #{decoder_block_forward.5} parent=31 // pred_check_branch
        %225 = sbr.rel (%p223) target = $region36
      $region35: #{decoder_block_forward.5} parent=31 // pred_region
        %s226 = smul.u32 2, %s20
        %p227 = scmp.lt.s32.totalorder %s19, 1
        %s228 = scalar_select %p227, %s19, 1
        %p229 = scmp.lt.s32.totalorder %s226, 1
        %s230 = scalar_select %p229, %s226, 1
        %s231 = smul.addr %s228, 2
        %s232 = sadd.s32 %s230, %s231
        %s233 = smul.addr %s232, 4
        %s234 = scalar_lea.vmem %s0, %s233
        %s235 = smul.u32 2, %s20
      $region36: #{decoder_block_forward.5} parent=31 // pred_fallthru
        _
      // Predicated region
      $region37: #{decoder_block_forward.5} parent=31 // pred_check
        %p236 = pneg %p74
      $region38: #{decoder_block_forward.5} parent=31 // pred_check_branch
        %238 = sbr.rel (%p236) target = $region40
      $region39: #{decoder_block_forward.5} parent=31 // pred_region
        %s239 = smul.u32 2, %s20
        %p240 = scmp.lt.s32.totalorder %s19, 1
        %s241 = scalar_select %p240, %s19, 1
        %p242 = scmp.lt.s32.totalorder %s239, 1
        %s243 = scalar_select %p242, %s239, 1
        %s244 = smul.addr %s241, 2
        %s245 = sadd.s32 %s243, %s244
        %s246 = smul.addr %s245, 4
        %s247 = scalar_lea.vmem %s1, %s246
        %s248 = smul.u32 2, %s20
      $region40: #{decoder_block_forward.5} parent=31 // pred_fallthru
        _
    $region32: #{decoder_block_forward.5} parent=5 // pred_fallthru
      _
    %p249 = scmp.le.s32.totalorder 1, %s12
    %p250 = scmp.lt.s32.totalorder %s12, 3
    %p251 = pnand %p249, %p250
    %p252 = pneg %p251
    // Predicated region
    $region41: #{decoder_block_forward.5} parent=5 // pred_check
      _
    $region42: #{decoder_block_forward.5} parent=5 // pred_check_branch
      %254 = sbr.rel (%p251) target = $region44
    $region43: #{decoder_block_forward.5} parent=5 // pred_region
      %s255 = ssub.s32 %s12, 1
      %s256 = smul.u32 2, %s22
      %p257 = scmp.lt.s32.totalorder %s21, 1
      %s258 = scalar_select %p257, %s21, 1
      %p259 = scmp.lt.s32.totalorder %s256, 1
      %s260 = scalar_select %p259, %s256, 1
      %s261 = smul.addr %s258, 2
      %s262 = sadd.s32 %s260, %s261
      %s263 = smul.addr %s262, 4
      %s264 = scalar_lea.vmem %s0, %s263
      %p265 = pneg %p52
      %p266 = pneg %p49
      %s267 = smul.u32 2, %s22
      %p268 = scmp.lt.s32.totalorder %s21, 1
      %s269 = scalar_select %p268, %s21, 1
      %p270 = scmp.lt.s32.totalorder %s267, 1
      %s271 = scalar_select %p270, %s267, 1
      %s272 = smul.addr %s269, 2
      %s273 = sadd.s32 %s271, %s272
      %s274 = smul.addr %s273, 4
      %s275 = scalar_lea.vmem %s1, %s274
      %p276 = pneg %p80
      %p277 = pneg %p77
      %p278 = pneg %p101
      %p279 = pneg %p98
      %p280 = pneg %p122
      %p281 = pneg %p119
      %p282 = pneg %p143
      %p283 = pneg %p140
      %p284 = pneg %p164
      %p285 = pneg %p161
      %p286 = pneg %p192
      %p287 = pneg %p189
      %s288 = smul.u32 2, %s22
      %p289 = scmp.lt.s32.totalorder %s21, 1
      %s290 = scalar_select %p289, %s21, 1
      %p291 = scmp.lt.s32.totalorder %s288, 1
      %s292 = scalar_select %p291, %s288, 1
      %s293 = smul.addr %s290, 4
      %s294 = sadd.s32 %s292, %s293
      %s295 = smul.addr %s294, 8
      %s296 = scalar_lea.vmem %s6, %s295
      %s297 = smul.u32 2, %s22
      %p298 = scmp.lt.s32.totalorder %s21, 1
      %s299 = scalar_select %p298, %s21, 1
      %p300 = scmp.lt.s32.totalorder %s297, 1
      %s301 = scalar_select %p300, %s297, 1
      %s302 = smul.addr %s299, 2
      %s303 = sadd.s32 %s301, %s302
      %s304 = smul.addr %s303, 4
      %s305 = scalar_lea.vmem %s0, %s304
      %s306 = smul.u32 2, %s22
      %s307 = smul.u32 2, %s22
      %p308 = scmp.lt.s32.totalorder %s21, 1
      %s309 = scalar_select %p308, %s21, 1
      %p310 = scmp.lt.s32.totalorder %s307, 1
      %s311 = scalar_select %p310, %s307, 1
      %s312 = smul.addr %s309, 2
      %s313 = sadd.s32 %s311, %s312
      %s314 = smul.addr %s313, 4
      %s315 = scalar_lea.vmem %s1, %s314
      %s316 = smul.u32 2, %s22
      %s317 = smul.u32 2, %s22
      %p318 = scmp.lt.s32.totalorder %s21, 1
      %s319 = scalar_select %p318, %s21, 1
      %p320 = scmp.lt.s32.totalorder %s317, 1
      %s321 = scalar_select %p320, %s317, 1
      %s322 = smul.addr %s319, 4
      %s323 = sadd.s32 %s321, %s322
      %s324 = smul.addr %s323, 8
      %s325 = scalar_lea.vmem %s6, %s324
      %s326 = smul.u32 2, %s22
      %v327 = vld [vmem:[%s315] sm:$0xff]
      %v328 = vld [vmem:[%s2] sm:$0xf]
      %330 = vset.pattern.permute.xlu0 0
      %331 = vperm.xlu0 %330, %v328
      %v332 = vpop.permute.xlu0 %331
      %v334 = vunpack.c.l.s4 839922192
      %v335 = vunpack.c.0.s8 %v334
      %v336 = vperm.slane %v332, %v335
      %v338 = vmul.f32 %v327, %v336
      %v339 = vld [vmem:[%s3] sm:$0xf]
      %341 = vset.pattern.permute.xlu0 0
      %342 = vperm.xlu0 %341, %v339
      %v343 = vpop.permute.xlu0 %342
      %v345 = vunpack.c.l.s4 839922192
      %v346 = vunpack.c.0.s8 %v345
      %v347 = vperm.slane %v343, %v346
      %v349 = vadd.f32 %v338, %v347
      %v350 = vmax.f32 %v349, 0.0
      %v351 = vld [vmem:[%s305] sm:$0xff]
      %v352 = vadd.f32 %v351, %v350
      %v353 = vld [vmem:[%s4] sm:$0xff]
      %v354 = vld [vmem:[%s4 + $0x8] sm:$0xff]
      %v355 = vld [vmem:[%s5] sm:$0xff]
      %v356 = vld [vmem:[%s5 + $0x8] sm:$0xff]
      %358 = vset.pattern.permute.xlu0 0
      %359 = vperm.xlu0 %358, %v355
      %v360 = vpop.permute.xlu0 %359
      %363 = vset.pattern.permute.xlu0 0
      %364 = vperm.xlu0 %363, %v356
      %v365 = vpop.permute.xlu0 %364
      %368 = vst [vmem:[#allocation1] ss:$2 sm:$0xff] %v352
      %v369 = vld.sshfl [vmem:[#allocation1] sm:$0xff pattern:$0x75316420]
      %v370 = vld.sshfl [vmem:[#allocation1 + $0x8] sm:$0xff pattern:$0x75316420]
      %vm371 = vcmask 31744
      %v373 = vsel %vm371, %v353, 0
      %v376 = vsel %vm371, %v354, 0
      %vm378 = vcmask 1043456
      %v379 = vsel %vm378, %v369, 0
      %v381 = vsel %vm378, %v370, 0
      %383 = vmatpush.msra.mxu0 0.0
      %384 = vmatpush.msra.mxu0 0.0
      %385 = vmatpush.msra.mxu0 0.0
      %386 = vmatpush.msra.mxu0 0.0
      %387 = vmatpush.msra.mxu0 0.0
      %388 = vmatpush.msra.mxu0 0.0
      %389 = vmatpush.msra.mxu0 0.0
      %390 = vmatpush.msra.mxu0 0.0
      %391 = vmatpush.msra.mxu0 0.0
      %392 = vmatpush.msra.mxu0 0.0
      %393 = vmatpush.msra.mxu0 0.0
      %394 = vmatpush.msra.mxu0 0.0
      %395 = vmatpush.msra.mxu0 0.0
      %396 = vmatpush.msra.mxu0 0.0
      %397 = vmatpush.msra.mxu0 0.0
      %398 = vmatpush.msra.mxu0 %v379
      %399 = vmatmul.f32.gmra.mxu0 %v373
      %v400 = vpop.f32.mrf.mxu0
      %v401 = vadd.f32 %v360, %v400
      %402 = vmatmul.f32.gmra.mxu0 %v376
      %v403 = vpop.f32.mrf.mxu0
      %v404 = vadd.f32 %v365, %v403
      %405 = vdwg.mxu0
      %406 = vmatpush.msra.mxu0 0.0
      %407 = vmatpush.msra.mxu0 0.0
      %408 = vmatpush.msra.mxu0 0.0
      %409 = vmatpush.msra.mxu0 0.0
      %410 = vmatpush.msra.mxu0 0.0
      %411 = vmatpush.msra.mxu0 0.0
      %412 = vmatpush.msra.mxu0 0.0
      %413 = vmatpush.msra.mxu0 0.0
      %414 = vmatpush.msra.mxu0 0.0
      %415 = vmatpush.msra.mxu0 0.0
      %416 = vmatpush.msra.mxu0 0.0
      %417 = vmatpush.msra.mxu0 0.0
      %418 = vmatpush.msra.mxu0 0.0
      %419 = vmatpush.msra.mxu0 0.0
      %420 = vmatpush.msra.mxu0 0.0
      %421 = vmatpush.msra.mxu0 %v381
      %422 = vmatmul.f32.gmra.mxu0 %v373
      %v423 = vpop.f32.mrf.mxu0
      %v424 = vadd.f32 %v360, %v423
      %425 = vmatmul.f32.gmra.mxu0 %v376
      %v426 = vpop.f32.mrf.mxu0
      %v427 = vadd.f32 %v365, %v426
      %428 = vdwg.mxu0
      %429 = vst [vmem:[%s325] sm:$0xff] %v401
      %430 = vst [vmem:[%s325 + $0x8] sm:$0xff] %v424
      %431 = vst [vmem:[%s325 + $0x10] sm:$0xff] %v404
      %432 = vst [vmem:[%s325 + $0x18] sm:$0xff] %v427
      %s433 = smul.u32 2, %s22
      %p434 = scmp.lt.s32.totalorder %s21, 1
      %s435 = scalar_select %p434, %s21, 1
      %p436 = scmp.lt.s32.totalorder %s433, 1
      %s437 = scalar_select %p436, %s433, 1
      %s438 = smul.addr %s435, 4
      %s439 = sadd.s32 %s437, %s438
      %s440 = smul.addr %s439, 8
      %s441 = scalar_lea.vmem %s6, %s440
      // Predicated region
      $region45: #{decoder_block_forward.5} parent=43 // pred_check
        %p442 = pneg %p189
      $region46: #{decoder_block_forward.5} parent=43 // pred_check_branch
        %444 = sbr.rel (%p442) target = $region48
      $region47: #{decoder_block_forward.5} parent=43 // pred_region
        %s445 = smul.u32 2, %s22
      $region48: #{decoder_block_forward.5} parent=43 // pred_fallthru
        _
    $region44: #{decoder_block_forward.5} parent=5 // pred_fallthru
      _
    %p446 = scmp.le.s32.totalorder 2, %s12
    // Predicated region
    $region49: #{decoder_block_forward.5} parent=5 // pred_check
      %p447 = pneg %p446
    $region50: #{decoder_block_forward.5} parent=5 // pred_check_branch
      %449 = sbr.rel (%p447) target = $region52
    $region51: #{decoder_block_forward.5} parent=5 // pred_region
      %s450 = ssub.s32 %s12, 2
      // Predicated region
      $region53: #{decoder_block_forward.5} parent=51 // pred_check
        %p451 = pneg %p195
      $region54: #{decoder_block_forward.5} parent=51 // pred_check_branch
        %453 = sbr.rel (%p451) target = $region56
      $region55: #{decoder_block_forward.5} parent=51 // pred_region
        %s454 = smul.u32 2, %s24
        %p455 = scmp.lt.s32.totalorder %s23, 1
        %s456 = scalar_select %p455, %s23, 1
        %p457 = scmp.lt.s32.totalorder %s454, 1
        %s458 = scalar_select %p457, %s454, 1
        %s459 = smul.addr %s456, 4
        %s460 = sadd.s32 %s458, %s459
        %s461 = smul.addr %s460, 8
        %s462 = scalar_lea.vmem %s6, %s461
      $region56: #{decoder_block_forward.5} parent=51 // pred_fallthru
        _
    $region52: #{decoder_block_forward.5} parent=5 // pred_fallthru
      _
  $region6: #{decoder_block_forward.5} parent=0 // loop_footer
    %s16 = sadd.s32 1, %s12
  $region7: #{decoder_block_forward.5} parent=0 // loop_footer_branch
    %11 = sbr.rel target = $region3
  $region8: #{decoder_block_forward.5} parent=0 // loop_exit
    _

// kernel: decoder_block_forward.4
$region0: #{decoder_block_forward.4}
  #allocation0 [shape = 'u32[]', space=smem, size = 0x4, offset = 0x4, fixed_abs, tag = 'smem constant byte address 0x4 - core index']
  #allocation1 [shape = 'u32[72,128]{1,0:T(1,128)}', space=vmem, size = 0x9000, scoped, tag = 'internal scratch']
  %s0 = inlined_call_operand.vmem [shape: f32[2,8,256], index: 0, kind: input, shape index: {}]
  %s1 = inlined_call_operand.vmem [shape: f32[8,1], index: 1, kind: input, shape index: {}]
  %s2 = inlined_call_operand.vmem [shape: f32[8,1], index: 2, kind: input, shape index: {}]
  %s3 = inlined_call_operand.vmem [shape: f32[4,72], index: 3, kind: input, shape index: {}]
  %s4 = inlined_call_operand.vmem [shape: f32[9,256], index: 4, kind: input, shape index: {}]
  %s5 = inlined_call_operand.vmem [shape: f32[2,4,256], index: 5, kind: output, shape index: {0}]
  %s6 = inlined_call_operand.vmem [shape: f32[2,8,128], index: 6, kind: output, shape index: {1}]
  %7 = xla_tuple %s5, %s6
  %s8 = sld [smem:[#allocation0]]
  $region61: #{decoder_block_forward.4} parent=0
    _
  %s10 = ssub.s32 1, %s8
  %s11 = scalar_select 0, %s10, %s8
  loop: start=0, step=1, limit=4
  $region2: #{decoder_block_forward.4} parent=0 // loop_pre_header
    _
  $region3: #{decoder_block_forward.4} parent=0 // loop_header
    %s13 = sphi 0, %s17
    %p14 = scmp.ge.s32.totalorder %s13, 4
    %s23 = sphi 0, %s25
    %s26 = sphi 0, %s23
    %s27 = sphi 0, %s26
    %s43 = sphi 0, %s27
    %s47 = sphi 0, %s47
    %s49 = sphi 0, %s47
    %s50 = sphi 0, %s49
    %s64 = sphi 0, %s50
    %s68 = sphi 0, %s68
    %s70 = sphi 0, %s68
    %s71 = sphi 0, %s70
    %s85 = sphi 0, %s71
    %s89 = sphi 0, %s89
    %s91 = sphi 0, %s89
    %s92 = sphi 0, %s91
    %s106 = sphi 0, %s92
    %s110 = sphi 0, %s110
    %s112 = sphi 0, %s110
    %s113 = sphi 0, %s112
    %s127 = sphi 0, %s113
    %s133 = sphi 0, %s135
    %s136 = sphi 0, %s133
    %s137 = sphi 0, %s136
    %s153 = sphi 0, %s137
    %s159 = sphi 0, %s161
    %s162 = sphi 0, %s159
    %s163 = sphi 0, %s162
    %s179 = sphi 0, %s163
  $region4: #{decoder_block_forward.4} parent=0 // loop_header_branch
    %16 = sbr.rel (%p14) target = $region8
  $region5: #{decoder_block_forward.4} parent=0 // loop_body
    %s18 = ssub.s32 %s13, 1
    %s19 = ssub.s32 %s13, 2
    %s20 = sadd.s32 %s13, 1
    %s21 = ssub.s32 %s13, %s20
    %p22 = scmp.eq.s32.totalorder %s21, 0
    %s24 = sadd.s32 %s23, 1
    %s25 = scalar_select %p22, %s23, %s24
    %p28 = pneg %p22
    %p29 = scmp.eq.s32.totalorder %s13, 1
    %p30 = por %p28, %p29
    %p31 = scmp.ne.s32.totalorder %s23, %s26
    %p32 = scmp.eq.s32.totalorder %s13, 0
    %p33 = por %p31, %p32
    %p34 = scmp.ne.s32.totalorder %s23, %s26
    %p35 = scmp.eq.s32.totalorder %s18, 1
    %p36 = por %p34, %p35
    %p37 = scmp.ne.s32.totalorder %s26, %s27
    %p38 = scmp.eq.s32.totalorder %s18, 0
    %p39 = por %p37, %p38
    %p40 = scmp.ne.s32.totalorder %s26, %s27
    %p41 = scmp.eq.s32.totalorder %s19, 1
    %p42 = por %p40, %p41
    %p44 = scmp.ne.s32.totalorder %s27, %s43
    %p45 = scmp.eq.s32.totalorder %s19, 0
    %p46 = por %p44, %p45
    %s48 = sadd.s32 %s47, 1
    %p51 = scmp.eq.s32.totalorder %s13, 1
    %p52 = scmp.ne.s32.totalorder %s47, %s49
    %p53 = scmp.eq.s32.totalorder %s13, 0
    %p54 = por %p52, %p53
    %p55 = scmp.ne.s32.totalorder %s47, %s49
    %p56 = scmp.eq.s32.totalorder %s18, 1
    %p57 = por %p55, %p56
    %p58 = scmp.ne.s32.totalorder %s49, %s50
    %p59 = scmp.eq.s32.totalorder %s18, 0
    %p60 = por %p58, %p59
    %p61 = scmp.ne.s32.totalorder %s49, %s50
    %p62 = scmp.eq.s32.totalorder %s19, 1
    %p63 = por %p61, %p62
    %p65 = scmp.ne.s32.totalorder %s50, %s64
    %p66 = scmp.eq.s32.totalorder %s19, 0
    %p67 = por %p65, %p66
    %s69 = sadd.s32 %s68, 1
    %p72 = scmp.eq.s32.totalorder %s13, 1
    %p73 = scmp.ne.s32.totalorder %s68, %s70
    %p74 = scmp.eq.s32.totalorder %s13, 0
    %p75 = por %p73, %p74
    %p76 = scmp.ne.s32.totalorder %s68, %s70
    %p77 = scmp.eq.s32.totalorder %s18, 1
    %p78 = por %p76, %p77
    %p79 = scmp.ne.s32.totalorder %s70, %s71
    %p80 = scmp.eq.s32.totalorder %s18, 0
    %p81 = por %p79, %p80
    %p82 = scmp.ne.s32.totalorder %s70, %s71
    %p83 = scmp.eq.s32.totalorder %s19, 1
    %p84 = por %p82, %p83
    %p86 = scmp.ne.s32.totalorder %s71, %s85
    %p87 = scmp.eq.s32.totalorder %s19, 0
    %p88 = por %p86, %p87
    %s90 = sadd.s32 %s89, 1
    %p93 = scmp.eq.s32.totalorder %s13, 1
    %p94 = scmp.ne.s32.totalorder %s89, %s91
    %p95 = scmp.eq.s32.totalorder %s13, 0
    %p96 = por %p94, %p95
    %p97 = scmp.ne.s32.totalorder %s89, %s91
    %p98 = scmp.eq.s32.totalorder %s18, 1
    %p99 = por %p97, %p98
    %p100 = scmp.ne.s32.totalorder %s91, %s92
    %p101 = scmp.eq.s32.totalorder %s18, 0
    %p102 = por %p100, %p101
    %p103 = scmp.ne.s32.totalorder %s91, %s92
    %p104 = scmp.eq.s32.totalorder %s19, 1
    %p105 = por %p103, %p104
    %p107 = scmp.ne.s32.totalorder %s92, %s106
    %p108 = scmp.eq.s32.totalorder %s19, 0
    %p109 = por %p107, %p108
    %s111 = sadd.s32 %s110, 1
    %p114 = scmp.eq.s32.totalorder %s13, 1
    %p115 = scmp.ne.s32.totalorder %s110, %s112
    %p116 = scmp.eq.s32.totalorder %s13, 0
    %p117 = por %p115, %p116
    %p118 = scmp.ne.s32.totalorder %s110, %s112
    %p119 = scmp.eq.s32.totalorder %s18, 1
    %p120 = por %p118, %p119
    %p121 = scmp.ne.s32.totalorder %s112, %s113
    %p122 = scmp.eq.s32.totalorder %s18, 0
    %p123 = por %p121, %p122
    %p124 = scmp.ne.s32.totalorder %s112, %s113
    %p125 = scmp.eq.s32.totalorder %s19, 1
    %p126 = por %p124, %p125
    %p128 = scmp.ne.s32.totalorder %s113, %s127
    %p129 = scmp.eq.s32.totalorder %s19, 0
    %p130 = por %p128, %p129
    %s131 = ssub.s32 %s13, %s20
    %p132 = scmp.eq.s32.totalorder %s131, 0
    %s134 = sadd.s32 %s133, 1
    %s135 = scalar_select %p132, %s133, %s134
    %p138 = pneg %p132
    %p139 = scmp.eq.s32.totalorder %s13, 1
    %p140 = por %p138, %p139
    %p141 = scmp.ne.s32.totalorder %s133, %s136
    %p142 = scmp.eq.s32.totalorder %s13, 0
    %p143 = por %p141, %p142
    %p144 = scmp.ne.s32.totalorder %s133, %s136
    %p145 = scmp.eq.s32.totalorder %s18, 1
    %p146 = por %p144, %p145
    %p147 = scmp.ne.s32.totalorder %s136, %s137
    %p148 = scmp.eq.s32.totalorder %s18, 0
    %p149 = por %p147, %p148
    %p150 = scmp.ne.s32.totalorder %s136, %s137
    %p151 = scmp.eq.s32.totalorder %s19, 1
    %p152 = por %p150, %p151
    %p154 = scmp.ne.s32.totalorder %s137, %s153
    %p155 = scmp.eq.s32.totalorder %s19, 0
    %p156 = por %p154, %p155
    %s157 = ssub.s32 %s13, %s20
    %p158 = scmp.eq.s32.totalorder %s157, 0
    %s160 = sadd.s32 %s159, 1
    %s161 = scalar_select %p158, %s159, %s160
    %p164 = pneg %p158
    %p165 = scmp.eq.s32.totalorder %s13, 1
    %p166 = por %p164, %p165
    %p167 = scmp.ne.s32.totalorder %s159, %s162
    %p168 = scmp.eq.s32.totalorder %s13, 0
    %p169 = por %p167, %p168
    %p170 = scmp.ne.s32.totalorder %s159, %s162
    %p171 = scmp.eq.s32.totalorder %s18, 1
    %p172 = por %p170, %p171
    %p173 = scmp.ne.s32.totalorder %s162, %s163
    %p174 = scmp.eq.s32.totalorder %s18, 0
    %p175 = por %p173, %p174
    %p176 = scmp.ne.s32.totalorder %s162, %s163
    %p177 = scmp.eq.s32.totalorder %s19, 1
    %p178 = por %p176, %p177
    %p180 = scmp.ne.s32.totalorder %s163, %s179
    %p181 = scmp.eq.s32.totalorder %s19, 0
    %p182 = por %p180, %p181
    %p183 = scmp.le.s32.totalorder 1, %s13
    %p184 = scmp.lt.s32.totalorder %s13, 3
    %p185 = pnand %p183, %p184
    %p186 = pneg %p185
    // Predicated region
    $region9: #{decoder_block_forward.4} parent=5 // pred_check
      _
    $region10: #{decoder_block_forward.4} parent=5 // pred_check_branch
      %188 = sbr.rel (%p185) target = $region12
    $region11: #{decoder_block_forward.4} parent=5 // pred_region
      %s189 = ssub.s32 %s13, 1
      // Predicated region
      $region13: #{decoder_block_forward.4} parent=11 // pred_check
        %p190 = pneg %p60
      $region14: #{decoder_block_forward.4} parent=11 // pred_check_branch
        %192 = sbr.rel (%p190) target = $region16
      $region15: #{decoder_block_forward.4} parent=11 // pred_region
        _
      $region16: #{decoder_block_forward.4} parent=11 // pred_fallthru
        _
      // Predicated region
      $region17: #{decoder_block_forward.4} parent=11 // pred_check
        %p193 = pneg %p81
      $region18: #{decoder_block_forward.4} parent=11 // pred_check_branch
        %195 = sbr.rel (%p193) target = $region20
      $region19: #{decoder_block_forward.4} parent=11 // pred_region
        _
      $region20: #{decoder_block_forward.4} parent=11 // pred_fallthru
        _
      // Predicated region
      $region21: #{decoder_block_forward.4} parent=11 // pred_check
        %p196 = pneg %p102
      $region22: #{decoder_block_forward.4} parent=11 // pred_check_branch
        %198 = sbr.rel (%p196) target = $region24
      $region23: #{decoder_block_forward.4} parent=11 // pred_region
        _
      $region24: #{decoder_block_forward.4} parent=11 // pred_fallthru
        _
      // Predicated region
      $region25: #{decoder_block_forward.4} parent=11 // pred_check
        %p199 = pneg %p123
      $region26: #{decoder_block_forward.4} parent=11 // pred_check_branch
        %201 = sbr.rel (%p199) target = $region28
      $region27: #{decoder_block_forward.4} parent=11 // pred_region
        _
      $region28: #{decoder_block_forward.4} parent=11 // pred_fallthru
        _
    $region12: #{decoder_block_forward.4} parent=5 // pred_fallthru
      _
    %p202 = scmp.lt.s32.totalorder %s13, 2
    // Predicated region
    $region29: #{decoder_block_forward.4} parent=5 // pred_check
      %p203 = pneg %p202
    $region30: #{decoder_block_forward.4} parent=5 // pred_check_branch
      %205 = sbr.rel (%p203) target = $region32
    $region31: #{decoder_block_forward.4} parent=5 // pred_region
      // Predicated region
      $region33: #{decoder_block_forward.4} parent=31 // pred_check
        %p206 = pneg %p33
      $region34: #{decoder_block_forward.4} parent=31 // pred_check_branch
        %208 = sbr.rel (%p206) target = $region36
      $region35: #{decoder_block_forward.4} parent=31 // pred_region
        %p209 = scmp.lt.s32.totalorder %s13, 1
        %s210 = scalar_select %p209, %s13, 1
        %s211 = smul.addr %s210, 2
        %s212 = smul.addr %s211, 8
        %s213 = scalar_lea.vmem %s0, %s212
      $region36: #{decoder_block_forward.4} parent=31 // pred_fallthru
        _
    $region32: #{decoder_block_forward.4} parent=5 // pred_fallthru
      _
    %p214 = scmp.le.s32.totalorder 1, %s13
    %p215 = scmp.lt.s32.totalorder %s13, 3
    %p216 = pnand %p214, %p215
    %p217 = pneg %p216
    // Predicated region
    $region37: #{decoder_block_forward.4} parent=5 // pred_check
      _
    $region38: #{decoder_block_forward.4} parent=5 // pred_check_branch
      %219 = sbr.rel (%p216) target = $region40
    $region39: #{decoder_block_forward.4} parent=5 // pred_region
      %s220 = ssub.s32 %s13, 1
      %p221 = scmp.lt.s32.totalorder %s18, 1
      %s222 = scalar_select %p221, %s18, 1
      %s223 = smul.addr %s222, 2
      %s224 = smul.addr %s223, 8
      %s225 = scalar_lea.vmem %s0, %s224
      %p226 = pneg %p39
      %p227 = pneg %p36
      %p228 = pneg %p60
      %p229 = pneg %p57
      %p230 = pneg %p81
      %p231 = pneg %p78
      %p232 = pneg %p102
      %p233 = pneg %p99
      %p234 = pneg %p123
      %p235 = pneg %p120
      %p236 = pneg %p149
      %p237 = pneg %p146
      %p238 = scmp.lt.s32.totalorder %s18, 1
      %s239 = scalar_select %p238, %s18, 1
      %s240 = smul.addr %s239, 2
      %s241 = smul.addr %s240, 4
      %s242 = scalar_lea.vmem %s5, %s241
      %p243 = pneg %p175
      %p244 = pneg %p172
      %p245 = scmp.lt.s32.totalorder %s18, 1
      %s246 = scalar_select %p245, %s18, 1
      %s247 = smul.addr %s246, 8
      %s248 = scalar_lea.vmem %s6, %s247
      %p249 = scmp.lt.s32.totalorder %s18, 1
      %s250 = scalar_select %p249, %s18, 1
      %s251 = smul.addr %s250, 2
      %s252 = smul.addr %s251, 8
      %s253 = scalar_lea.vmem %s0, %s252
      %p254 = scmp.lt.s32.totalorder %s18, 1
      %s255 = scalar_select %p254, %s18, 1
      %s256 = smul.addr %s255, 2
      %s257 = smul.addr %s256, 4
      %s258 = scalar_lea.vmem %s5, %s257
      %p259 = scmp.lt.s32.totalorder %s18, 1
      %s260 = scalar_select %p259, %s18, 1
      %s261 = smul.addr %s260, 8
      %s262 = scalar_lea.vmem %s6, %s261
      %v263 = vld [vmem:[%s253] sm:$0xff]
      %v264 = vld [vmem:[%s253 + $0x8] sm:$0xff]
      %v265 = vld [vmem:[%s1] sm:$0xff]
      %267 = vset.pattern.permute.xlu0 0
      %268 = vperm.xlu0 %267, %v265
      %v269 = vpop.permute.xlu0 %268
      %v271 = vmul.f32 %v263, %v269
      %v272 = vmul.f32 %v264, %v269
      %v273 = vld [vmem:[%s2] sm:$0xff]
      %275 = vset.pattern.permute.xlu0 0
      %276 = vperm.xlu0 %275, %v273
      %v277 = vpop.permute.xlu0 %276
      %v279 = vadd.f32 %v271, %v277
      %v280 = vadd.f32 %v272, %v277
      %v281 = vmax.f32 %v279, 0.0
      %v282 = vmax.f32 %v280, 0.0
      %283 = vrot.lane.b32.xlu0 %v281, 17
      %v284 = vpop.permute.xlu0 %283
      %285 = vrot.lane.b32.xlu0 %v282, 17
      %v286 = vpop.permute.xlu0 %285
      %v287 = vlaneseq
      %v288 = vand.u32 %v287, 127
      %vm289 = vcmp.lt.s32.totalorder %v288, 17
      %v290 = vsel %vm289, %v284, %v286
      %v291 = vsel %vm289, %v286, %v284
      %v292 = vld [vmem:[%s4] ss:$8 sm:$0x3]
      %v294 = vperm.slane %v292, 0
      %v295 = vperm.slane %v292, 1
      %v298 = vmul.f32 %v291, %v294
      %v299 = vmul.f32 %v290, %v295
      %300 = vrot.lane.b32.xlu0 %v281, 16
      %v301 = vpop.permute.xlu0 %300
      %302 = vrot.lane.b32.xlu0 %v282, 16
      %v303 = vpop.permute.xlu0 %302
      %vm304 = vcmp.lt.s32.totalorder %v288, 16
      %v305 = vsel %vm304, %v301, %v303
      %v306 = vsel %vm304, %v303, %v301
      %s307 = scalar_lea.vmem %s4, 1
      %v308 = vld [vmem:[%s307] ss:$8 sm:$0x3]
      %v310 = vperm.slane %v308, 0
      %v311 = vperm.slane %v308, 1
      %v314 = vmul.f32 %v306, %v310
      %v315 = vmul.f32 %v305, %v311
      %316 = vrot.lane.b32.xlu0 %v281, 15
      %v317 = vpop.permute.xlu0 %316
      %318 = vrot.lane.b32.xlu0 %v282, 15
      %v319 = vpop.permute.xlu0 %318
      %vm320 = vcmp.lt.s32.totalorder %v288, 15
      %v321 = vsel %vm320, %v317, %v319
      %v322 = vsel %vm320, %v319, %v317
      %s323 = scalar_lea.vmem %s4, 2
      %v324 = vld [vmem:[%s323] ss:$8 sm:$0x3]
      %v326 = vperm.slane %v324, 0
      %v327 = vperm.slane %v324, 1
      %v330 = vmul.f32 %v322, %v326
      %v331 = vmul.f32 %v321, %v327
      %332 = vrot.lane.b32.xlu0 %v281, 1
      %v333 = vpop.permute.xlu0 %332
      %334 = vrot.lane.b32.xlu0 %v282, 1
      %v335 = vpop.permute.xlu0 %334
      %vm336 = vcmp.lt.s32.totalorder %v288, 1
      %v337 = vsel %vm336, %v333, %v335
      %v338 = vsel %vm336, %v335, %v333
      %s339 = scalar_lea.vmem %s4, 3
      %v340 = vld [vmem:[%s339] ss:$8 sm:$0x3]
      %v342 = vperm.slane %v340, 0
      %v343 = vperm.slane %v340, 1
      %v346 = vmul.f32 %v338, %v342
      %v347 = vmul.f32 %v337, %v343
      %348 = vrot.lane.b32.xlu0 %v281, 127
      %v349 = vpop.permute.xlu0 %348
      %350 = vrot.lane.b32.xlu0 %v282, 127
      %v351 = vpop.permute.xlu0 %350
      %vm352 = vcmp.lt.s32.totalorder %v288, 127
      %v353 = vsel %vm352, %v349, %v351
      %v354 = vsel %vm352, %v351, %v349
      %s355 = scalar_lea.vmem %s4, 5
      %v356 = vld [vmem:[%s355] ss:$8 sm:$0x3]
      %v358 = vperm.slane %v356, 0
      %v359 = vperm.slane %v356, 1
      %v362 = vmul.f32 %v353, %v358
      %v363 = vmul.f32 %v354, %v359
      %364 = vrot.lane.b32.xlu0 %v281, 113
      %v365 = vpop.permute.xlu0 %364
      %366 = vrot.lane.b32.xlu0 %v282, 113
      %v367 = vpop.permute.xlu0 %366
      %vm368 = vcmp.lt.s32.totalorder %v288, 113
      %v369 = vsel %vm368, %v365, %v367
      %v370 = vsel %vm368, %v367, %v365
      %s371 = scalar_lea.vmem %s4, 6
      %v372 = vld [vmem:[%s371] ss:$8 sm:$0x3]
      %v374 = vperm.slane %v372, 0
      %v375 = vperm.slane %v372, 1
      %v378 = vmul.f32 %v369, %v374
      %v379 = vmul.f32 %v370, %v375
      %380 = vrot.lane.b32.xlu0 %v281, 112
      %v381 = vpop.permute.xlu0 %380
      %382 = vrot.lane.b32.xlu0 %v282, 112
      %v383 = vpop.permute.xlu0 %382
      %vm384 = vcmp.lt.s32.totalorder %v288, 112
      %v385 = vsel %vm384, %v381, %v383
      %v386 = vsel %vm384, %v383, %v381
      %s387 = scalar_lea.vmem %s4, 7
      %v388 = vld [vmem:[%s387] ss:$8 sm:$0x3]
      %v390 = vperm.slane %v388, 0
      %v391 = vperm.slane %v388, 1
      %v394 = vmul.f32 %v385, %v390
      %v395 = vmul.f32 %v386, %v391
      %396 = vrot.lane.b32.xlu0 %v281, 111
      %v397 = vpop.permute.xlu0 %396
      %398 = vrot.lane.b32.xlu0 %v282, 111
      %v399 = vpop.permute.xlu0 %398
      %vm400 = vcmp.lt.s32.totalorder %v288, 111
      %v401 = vsel %vm400, %v397, %v399
      %v402 = vsel %vm400, %v399, %v397
      %s403 = scalar_lea.vmem %s4, 16
      %v404 = vld [vmem:[%s403] ss:$8 sm:$0x3]
      %v406 = vperm.slane %v404, 0
      %v407 = vperm.slane %v404, 1
      %v410 = vmul.f32 %v401, %v406
      %v411 = vmul.f32 %v402, %v407
      %v412 = vld [vmem:[%s3] sm:$0xf]
      %vm413 = vcmask 588800
      %v415 = vsel %vm413, %v412, 0
      %417 = vmatpush.msra.mxu0 0.0
      %418 = vmatpush.msra.mxu0 0.0
      %419 = vmatpush.msra.mxu0 0.0
      %420 = vmatpush.msra.mxu0 0.0
      %421 = vmatpush.msra.mxu0 0.0
      %422 = vmatpush.msra.mxu0 0.0
      %423 = vmatpush.msra.mxu0 0.0
      %424 = vmatpush.msra.mxu0 %v410
      %425 = vmatpush.msra.mxu0 %v394
      %426 = vmatpush.msra.mxu0 %v378
      %427 = vmatpush.msra.mxu0 %v362
      %428 = vmatpush.msra.mxu0 %v281
      %429 = vmatpush.msra.mxu0 %v346
      %430 = vmatpush.msra.mxu0 %v330
      %431 = vmatpush.msra.mxu0 %v314
      %432 = vmatpush.msra.mxu0 %v298
      %433 = vmatmul.f32.gmra.mxu0 %v415
      %v434 = vpop.f32.mrf.mxu0
      %v435 = vadd.f32 0.0, %v434
      %436 = vdwg.mxu0
      %437 = vmatpush.msra.mxu0 0.0
      %438 = vmatpush.msra.mxu0 0.0
      %439 = vmatpush.msra.mxu0 0.0
      %440 = vmatpush.msra.mxu0 0.0
      %441 = vmatpush.msra.mxu0 0.0
      %442 = vmatpush.msra.mxu0 0.0
      %443 = vmatpush.msra.mxu0 0.0
      %444 = vmatpush.msra.mxu0 %v411
      %445 = vmatpush.msra.mxu0 %v395
      %446 = vmatpush.msra.mxu0 %v379
      %447 = vmatpush.msra.mxu0 %v363
      %448 = vmatpush.msra.mxu0 %v282
      %449 = vmatpush.msra.mxu0 %v347
      %450 = vmatpush.msra.mxu0 %v331
      %451 = vmatpush.msra.mxu0 %v315
      %452 = vmatpush.msra.mxu0 %v299
      %453 = vmatmul.f32.gmra.mxu0 %v415
      %v454 = vpop.f32.mrf.mxu0
      %v455 = vadd.f32 0.0, %v454
      %456 = vdwg.mxu0
      %v459 = vrot.slane %v455, 4
      %vm460 = vcmask 1043456
      %v461 = vsel %vm460, %v435, %v459
      %463 = vst [vmem:[%s258] sm:$0xff] %v461
      %v464 = vsel %vm460, %v435, 0.0
      %v465 = vsel %vm460, %v455, 0.0
      %v466 = vadd.f32 %v464, %v465
      %467 = vadd.xlane.f32.xlu0 %v466
      %v468 = vpop.xlane.xlu0 %467
      %v469 = vmul.f32 %v435, %v435
      %v470 = vmul.f32 %v455, %v455
      %v471 = vsel %vm460, %v469, 0.0
      %v472 = vsel %vm460, %v470, 0.0
      %v473 = vadd.f32 %v471, %v472
      %474 = vadd.xlane.f32.xlu0 %v473
      %v475 = vpop.xlane.xlu0 %474
      %v477 = vrot.slane %v475, 4
      %v479 = vsel %vm460, %v468, %v477
      %481 = vset.pattern.permute.xlu0 0
      %482 = vperm.xlu0 %481, %v479
      %v483 = vpop.permute.xlu0 %482
      %485 = vst [vmem:[%s262] sm:$0xff] %v483
      %p486 = scmp.lt.s32.totalorder %s18, 1
      %s487 = scalar_select %p486, %s18, 1
      %s488 = smul.addr %s487, 2
      %s489 = smul.addr %s488, 4
      %s490 = scalar_lea.vmem %s5, %s489
      %p491 = scmp.lt.s32.totalorder %s18, 1
      %s492 = scalar_select %p491, %s18, 1
      %s493 = smul.addr %s492, 8
      %s494 = scalar_lea.vmem %s6, %s493
      // Predicated region
      $region41: #{decoder_block_forward.4} parent=39 // pred_check
        %p495 = pneg %p146
      $region42: #{decoder_block_forward.4} parent=39 // pred_check_branch
        %497 = sbr.rel (%p495) target = $region44
      $region43: #{decoder_block_forward.4} parent=39 // pred_region
        _
      $region44: #{decoder_block_forward.4} parent=39 // pred_fallthru
        _
      // Predicated region
      $region45: #{decoder_block_forward.4} parent=39 // pred_check
        %p498 = pneg %p172
      $region46: #{decoder_block_forward.4} parent=39 // pred_check_branch
        %500 = sbr.rel (%p498) target = $region48
      $region47: #{decoder_block_forward.4} parent=39 // pred_region
        _
      $region48: #{decoder_block_forward.4} parent=39 // pred_fallthru
        _
    $region40: #{decoder_block_forward.4} parent=5 // pred_fallthru
      _
    %p501 = scmp.le.s32.totalorder 2, %s13
    // Predicated region
    $region49: #{decoder_block_forward.4} parent=5 // pred_check
      %p502 = pneg %p501
    $region50: #{decoder_block_forward.4} parent=5 // pred_check_branch
      %504 = sbr.rel (%p502) target = $region52
    $region51: #{decoder_block_forward.4} parent=5 // pred_region
      %s505 = ssub.s32 %s13, 2
      // Predicated region
      $region53: #{decoder_block_forward.4} parent=51 // pred_check
        %p506 = pneg %p152
      $region54: #{decoder_block_forward.4} parent=51 // pred_check_branch
        %508 = sbr.rel (%p506) target = $region56
      $region55: #{decoder_block_forward.4} parent=51 // pred_region
        %p509 = scmp.lt.s32.totalorder %s19, 1
        %s510 = scalar_select %p509, %s19, 1
        %s511 = smul.addr %s510, 2
        %s512 = smul.addr %s511, 4
        %s513 = scalar_lea.vmem %s5, %s512
      $region56: #{decoder_block_forward.4} parent=51 // pred_fallthru
        _
      // Predicated region
      $region57: #{decoder_block_forward.4} parent=51 // pred_check
        %p514 = pneg %p178
      $region58: #{decoder_block_forward.4} parent=51 // pred_check_branch
        %516 = sbr.rel (%p514) target = $region60
      $region59: #{decoder_block_forward.4} parent=51 // pred_region
        %p517 = scmp.lt.s32.totalorder %s19, 1
        %s518 = scalar_select %p517, %s19, 1
        %s519 = smul.addr %s518, 8
        %s520 = scalar_lea.vmem %s6, %s519
      $region60: #{decoder_block_forward.4} parent=51 // pred_fallthru
        _
    $region52: #{decoder_block_forward.4} parent=5 // pred_fallthru
      _
  $region6: #{decoder_block_forward.4} parent=0 // loop_footer
    %s17 = sadd.s32 1, %s13
  $region7: #{decoder_block_forward.4} parent=0 // loop_footer_branch
    %12 = sbr.rel target = $region3
  $region8: #{decoder_block_forward.4} parent=0 // loop_exit
    _

</llo_original>
